<compile_context>
chip_gen: v7x
topology: tpu7x:2x2x1
jax: 0.10.0
libtpu: 0.0.40
codegen_flags: <defaults>
</compile_context>

<pallas_src>
import functools
import math

import jax
import jax.numpy as jnp
from jax.experimental import pallas as pl
from jax.experimental.pallas import tpu as pltpu


def _round_up(v, m):
    return (v + m - 1) // m * m


def _default_vmem_budget():
    """Generation-aware VMEM budget (~65% of physical, capped)."""
    cap = 64 * 1024 * 1024  # safe fallback (v7x-sized)
    try:
        info = pltpu.get_tpu_info()
        cap = int(getattr(info, "vmem_capacity_bytes", cap)) or cap
    except Exception:
        pass
    return min(int(cap * 0.65), 100 * 1024 * 1024)


def _pick_tile_h(H, W, Cin, CoutP, K, esize, out_esize, vmem_budget_bytes):
    """Pick the output-row tile height from a VMEM budget."""
    KK = K * K
    Wp = W + K - 1
    fixed = (3 * KK * Cin * CoutP * esize        # weight input (x2 bufs) + wmod scratch
             + 2 * Cin * 128 * max(esize, 4)     # style column (x2, lane padded)
             + 4 * 8 * CoutP * 4                 # demod / act-bias blocks
             + (2 << 20))                        # Mosaic-internal scratch / misc slack
    per_row = (2 * Wp * Cin * esize              # halo'd input slab rows (x2 bufs)
               + 2 * W * CoutP * out_esize       # output rows (x2 bufs)
               + 2 * W * CoutP * 4               # f32 accumulator + epilogue temporaries
               + 2 * W * 128 * 4)                # noise column rows (x2, lane padded)
    avail = vmem_budget_bytes - fixed
    if avail <= per_row:
        return 8
    return int(min(max(1, avail // per_row), 1024))


def _styled_conv_kernel(s_ref, demod_ref, ab_ref, w_ref, slab_ref, noise_ref,
                        out_ref, wmod_ref, *, K, tile_h, W, cache_wmod):
    """One (batch, row-tile) grid step.

    Shapes (P suffix = padded to a 128-lane multiple):
      s_ref     (1, Cin, 1)                 compute_dtype   per-batch style scale
      demod_ref (1, 1, CoutP)               f32             per-batch demodulation
      ab_ref    (1, CoutP)                  f32             FusedLeakyReLU bias
      w_ref     (K*K, Cin, CoutP)           compute_dtype   conv_scale * W, tap-major
      slab_ref  (1, 1, tile_h+K-1, W+K-1, Cin) compute_dtype halo'd NHWC input rows
      noise_ref (1, tile_h*W, 1)            f32             noise_weight * noise
      out_ref   (1, tile_h*W, CoutP)        out_dtype
      wmod_ref  (K*K, Cin, CoutP)           compute_dtype   VMEM scratch (per-batch cache)
    """
    def _modulate():
        # wmod[tap, c, o] = (conv_scale * W)[tap, c, o] * s[c]
        # (demodulation is applied post-matmul in f32)
        wmod_ref[...] = w_ref[...] * s_ref[...]

    if cache_wmod:
        # b is the outer grid axis and t is "arbitrary" -> refresh once per batch.
        pl.when(pl.program_id(1) == 0)(_modulate)
    else:
        _modulate()

    # Modulated conv = K*K shifted matmuls against the halo'd slab (f32 accumulation).
    acc = None
    for dy in range(K):
        for dx in range(K):
            patch = slab_ref[0, 0, dy:dy + tile_h, dx:dx + W, :]
            patch = patch.reshape(tile_h * W, patch.shape[-1])
            contrib = jnp.dot(patch, wmod_ref[dy * K + dx],
                              preferred_element_type=jnp.float32)
            acc = contrib if acc is None else acc + contrib

    # Demodulation + NoiseInjection + FusedLeakyReLU, all f32.
    acc = acc * demod_ref[0]            # (1, CoutP) broadcast over rows
    acc = acc + noise_ref[0]            # (tile_h*W, 1) broadcast over channels
    acc = acc + ab_ref[...]             # (1, CoutP)
    out = jnp.where(acc >= 0.0, acc, 0.2 * acc) * math.sqrt(2.0)
    out_ref[0] = out.astype(out_ref.dtype)


def init_styled_conv_params(key, in_channel, out_channel, kernel_size, style_dim):
    """Parameter init matching the PyTorch module's __init__ shapes."""
    k1, k2 = jax.random.split(key, 2)
    return {
        # ModulatedConv2d.weight : (1, Cout, Cin, K, K), randn
        "conv_weight": jax.random.normal(
            k1, (1, out_channel, in_channel, kernel_size, kernel_size),
            jnp.float32),
        # EqualLinear (modulation): weight (Cin, style_dim) ~ randn / lr_mul(=1)
        "mod_weight": jax.random.normal(k2, (in_channel, style_dim), jnp.float32),
        # EqualLinear bias, bias_init=1
        "mod_bias": jnp.ones((in_channel,), jnp.float32),
        # NoiseInjection.weight : zeros(1)
        "noise_weight": jnp.zeros((1,), jnp.float32),
        # FusedLeakyReLU bias : zeros(Cout)
        "act_bias": jnp.zeros((out_channel,), jnp.float32),
    }


def styled_conv(x, style, noise, params, kernel_size, *,
                compute_dtype=jnp.bfloat16, out_dtype=jnp.float32,
                tile_h=None, vmem_budget_bytes=None):
    """StyledConv forward.

    x: (B, Cin, H, W) NCHW float32, style: (B, style_dim), noise: (B, 1, H, W).
    Returns (B, Cout, H, W) in out_dtype (float32 by default, matching PyTorch).
    """
    B, Cin, H, W = x.shape
    style_dim = style.shape[1]
    Cout = params["conv_weight"].shape[1]
    K = kernel_size          # assumed odd (StyleGAN2 uses 1 or 3)
    pad = K // 2
    KK = K * K
    Wp = W + K - 1
    CoutP = _round_up(Cout, 128)
    esize = jnp.dtype(compute_dtype).itemsize
    out_esize = jnp.dtype(out_dtype).itemsize

    if vmem_budget_bytes is None:
        vmem_budget_bytes = _default_vmem_budget()
    if tile_h is None:
        tile_h = _pick_tile_h(H, W, Cin, CoutP, K, esize, out_esize, vmem_budget_bytes)

    # Row-tile constraints: a partial-height tile must keep tile_h*W an 8-multiple
    # (lane/sublane layout of the output / noise blocks).
    tile_h = max(1, min(int(tile_h), H))
    if tile_h < H:
        tile_h = min(max(8, (tile_h // 8) * 8), H)
    n_tiles = -(-H // tile_h)
    if n_tiles == 1:
        tile_h = H
    H_pad = n_tiles * tile_h

    conv_scale = 1.0 / math.sqrt(Cin * KK)
    eq_scale = 1.0 / math.sqrt(style_dim)  # lr_mul = 1

    # ---- tiny per-batch vectors, precomputed in XLA ----
    s = style @ (params["mod_weight"] * eq_scale).T + params["mod_bias"]      # (B, Cin)
    w0 = conv_scale * params["conv_weight"][0]                                # (Cout,Cin,K,K)
    wsq = jnp.sum(w0 * w0, axis=(2, 3))                                       # (Cout, Cin)
    demod = jax.lax.rsqrt((s * s) @ wsq.T + 1e-8)                             # (B, Cout)

    s_col = s.astype(compute_dtype)[:, :, None]                               # (B, Cin, 1)
    demod_p = jnp.pad(demod, ((0, 0), (0, CoutP - Cout)))[:, None, :]         # (B, 1, CoutP)
    ab = jnp.pad(params["act_bias"].astype(jnp.float32),
                 (0, CoutP - Cout))[None, :]                                  # (1, CoutP)

    # ---- weight in tap-major order: (K*K, Cin, CoutP), tap index dy*K + dx ----
    w_taps = jnp.transpose(w0, (2, 3, 1, 0)).reshape(KK, Cin, Cout)
    w_taps = jnp.pad(w_taps, ((0, 0), (0, 0), (0, CoutP - Cout)))
    w_taps = w_taps.astype(compute_dtype)

    # ---- halo'd NHWC row slabs (no K^2 im2col amplification) ----
    x_nhwc = jnp.transpose(x, (0, 2, 3, 1)).astype(compute_dtype)             # (B,H,W,Cin)
    top = pad
    bottom = (H_pad + K - 1) - (pad + H)                                      # >= 0
    xp = jnp.pad(x_nhwc, ((0, 0), (top, bottom), (pad, pad), (0, 0)))         # (B,H_pad+K-1,Wp,Cin)
    slabs = jnp.stack(
        [xp[:, t * tile_h: t * tile_h + tile_h + K - 1] for t in range(n_tiles)],
        axis=1)                                                               # (B,n_tiles,tile_h+K-1,Wp,Cin)

    # ---- noise, pre-scaled by noise_weight, flat lane-1 column ----
    nz = (params["noise_weight"][0] * noise.reshape(B, H, W)).astype(jnp.float32)
    nz = jnp.pad(nz, ((0, 0), (0, H_pad - H), (0, 0))).reshape(B, H_pad * W, 1)

    # Cache the modulated weight per batch (t "arbitrary") unless B == 1 with multiple
    # spatial tiles, where keeping t "parallel" preserves 2-core occupancy on v7x.
    cache_wmod = (B > 1) or (n_tiles == 1)

    kernel = functools.partial(_styled_conv_kernel, K=K, tile_h=tile_h, W=W,
                               cache_wmod=cache_wmod)
    vmem_limit = int(min(max(int(vmem_budget_bytes * 1.3), 32 * 1024 * 1024),
                         120 * 1024 * 1024))

    out = pl.pallas_call(
        kernel,
        out_shape=jax.ShapeDtypeStruct((B, H_pad * W, CoutP), out_dtype),
        grid_spec=pltpu.PrefetchScalarGridSpec(
            num_scalar_prefetch=0,
            grid=(B, n_tiles),
            in_specs=[
                pl.BlockSpec((1, Cin, 1), lambda b, t: (b, 0, 0)),            # s
                pl.BlockSpec((1, 1, CoutP), lambda b, t: (b, 0, 0)),          # demod
                pl.BlockSpec((1, CoutP), lambda b, t: (0, 0)),                # act bias
                pl.BlockSpec((KK, Cin, CoutP), lambda b, t: (0, 0, 0)),       # weight taps
                pl.BlockSpec((1, 1, tile_h + K - 1, Wp, Cin),
                             lambda b, t: (b, t, 0, 0, 0)),                   # halo'd slab
                pl.BlockSpec((1, tile_h * W, 1), lambda b, t: (b, t, 0)),     # noise
            ],
            out_specs=pl.BlockSpec((1, tile_h * W, CoutP), lambda b, t: (b, t, 0)),
            scratch_shapes=[pltpu.VMEM((KK, Cin, CoutP), compute_dtype)],     # wmod cache
        ),
        compiler_params=pltpu.CompilerParams(
            dimension_semantics=("parallel",
                                 "arbitrary" if cache_wmod else "parallel"),
            vmem_limit_bytes=vmem_limit,
        ),
    )(s_col, demod_p, ab, w_taps, slabs, nz)

    # (B, H_pad*W, CoutP) -> strip row/lane padding -> NCHW.
    out = out[:, :H * W, :Cout].reshape(B, H, W, Cout).transpose(0, 3, 1, 2)
    return out.astype(out_dtype)


def _reference(x, style, noise, params, kernel_size):
    """Plain-JAX reference mirroring the PyTorch fused path."""
    B, Cin, H, W = x.shape
    style_dim = style.shape[1]
    K = kernel_size
    pad = K // 2
    conv_scale = 1.0 / math.sqrt(Cin * K * K)
    eq_scale = 1.0 / math.sqrt(style_dim)

    s = style @ (params["mod_weight"] * eq_scale).T + params["mod_bias"]    # (B, Cin)
    w = conv_scale * params["conv_weight"] * s[:, None, :, None, None]      # (B,Cout,Cin,K,K)
    demod = jax.lax.rsqrt(jnp.sum(w ** 2, axis=(2, 3, 4)) + 1e-08)          # (B, Cout)
    w = w * demod[:, :, None, None, None]

    outs = []
    for b in range(B):
        o = jax.lax.conv_general_dilated(
            x[b:b + 1], w[b], window_strides=(1, 1),
            padding=((pad, pad), (pad, pad)),
            dimension_numbers=("NCHW", "OIHW", "NCHW"))
        outs.append(o)
    out = jnp.concatenate(outs, axis=0)
    out = out + params["noise_weight"][0] * noise
    out = out + params["act_bias"][None, :, None, None]
    out = jnp.where(out >= 0.0, out, 0.2 * out) * math.sqrt(2.0)
    return out


if __name__ == "__main__":
    B, Cin, Cout, K, style_dim, H, W = 2, 4, 8, 3, 32, 16, 16

    key = jax.random.PRNGKey(0)
    kx, ks, kn, kp, kb = jax.random.split(key, 5)
    x = jax.random.normal(kx, (B, Cin, H, W), jnp.float32)
    style = jax.random.normal(ks, (B, style_dim), jnp.float32)
    noise = jax.random.normal(kn, (B, 1, H, W), jnp.float32)
    params = init_styled_conv_params(kp, Cin, Cout, K, style_dim)
    # Non-trivial noise/bias parameters so those paths are actually exercised.
    params["noise_weight"] = jnp.full((1,), 0.1, jnp.float32)
    params["act_bias"] = 0.1 * jax.random.normal(kb, (Cout,), jnp.float32)

    ref = _reference(x, style, noise, params, K)

    # 1) f32 path, tile_h=8 -> 2 row tiles, per-batch wmod cache exercised.
    out_f32 = styled_conv(x, style, noise, params, K,
                          compute_dtype=jnp.float32, tile_h=8)
    out_f32 = jax.block_until_ready(out_f32)
    assert out_f32.shape == (B, Cout, H, W)
    assert jnp.all(jnp.isfinite(out_f32))
    assert jnp.allclose(out_f32, ref, atol=2e-2, rtol=2e-2), "f32 mismatch vs reference"

    # 2) default bf16 MXU path with auto VMEM-budgeted tile (single full-height tile).
    out_bf16 = styled_conv(x, style, noise, params, K)
    out_bf16 = jax.block_until_ready(out_bf16)
    assert out_bf16.shape == (B, Cout, H, W)
    assert jnp.all(jnp.isfinite(out_bf16))
    assert jnp.allclose(out_bf16, ref, atol=5e-2, rtol=5e-2), "bf16 mismatch vs reference"

    # 3) B == 1 path: per-tile modulation, both grid axes "parallel" (v7x friendly).
    out_b1 = styled_conv(x[:1], style[:1], noise[:1], params, K, tile_h=8)
    out_b1 = jax.block_until_ready(out_b1)
    assert out_b1.shape == (1, Cout, H, W)
    assert jnp.allclose(out_b1, ref[:1], atol=5e-2, rtol=5e-2), "B=1 mismatch vs reference"

    print("KERNEL_OK")
</pallas_src>

<mosaic_0001>
module attributes {stable_mosaic.version = 11 : i64} {
  func.func @_styled_conv_kernel(%arg0: i32, %arg1: i32, %arg2: memref<1x4x1xf32, #tpu.memory_space<vmem>>, %arg3: memref<1x1x128xf32, #tpu.memory_space<vmem>>, %arg4: memref<1x128xf32, #tpu.memory_space<vmem>>, %arg5: memref<9x4x128xf32, #tpu.memory_space<vmem>>, %arg6: memref<1x1x10x18x4xf32, #tpu.memory_space<vmem>>, %arg7: memref<1x128x1xf32, #tpu.memory_space<vmem>>, %arg8: memref<1x128x128xf32, #tpu.memory_space<vmem>>, %arg9: memref<9x4x128xf32, #tpu.memory_space<vmem>>) attributes {dimension_semantics = [#tpu.dimension_semantics<parallel>, #tpu.dimension_semantics<arbitrary>], iteration_bounds = array<i64: 2, 2>, scalar_prefetch = 0 : i64, scratch_operands = 1 : i64, tpu.core_type = #tpu.core_type<tc>, window_params = [{transform_indices = @transform_0, window_bounds = array<i64: 1, 4, 1>}, {transform_indices = @transform_1, window_bounds = array<i64: 1, 1, 128>}, {pipeline_mode = #tpu.pipeline_mode<synchronous>, transform_indices = @transform_2, window_bounds = array<i64: 1, 128>}, {pipeline_mode = #tpu.pipeline_mode<synchronous>, transform_indices = @transform_3, window_bounds = array<i64: 9, 4, 128>}, {transform_indices = @transform_4, window_bounds = array<i64: 1, 1, 10, 18, 4>}, {transform_indices = @transform_5, window_bounds = array<i64: 1, 128, 1>}, {transform_indices = @transform_6, window_bounds = array<i64: 1, 128, 128>}]} {
    %c0_i32 = arith.constant 0 : i32
    %0 = arith.cmpi eq, %arg1, %c0_i32 : i32
    %1 = arith.extui %0 : i1 to i32
    %c0_i32_0 = arith.constant 0 : i32
    %2 = arith.cmpi ne, %1, %c0_i32_0 : i32
    scf.if %2 {
      %c0_86 = arith.constant 0 : index
      %c0_87 = arith.constant 0 : index
      %c0_88 = arith.constant 0 : index
      %86 = vector.load %arg5[%c0_86, %c0_87, %c0_88] : memref<9x4x128xf32, #tpu.memory_space<vmem>>, vector<9x4x128xf32>
      %c0_89 = arith.constant 0 : index
      %c0_90 = arith.constant 0 : index
      %c0_91 = arith.constant 0 : index
      %87 = vector.load %arg2[%c0_89, %c0_90, %c0_91] : memref<1x4x1xf32, #tpu.memory_space<vmem>>, vector<1x4x1xf32>
      %88 = vector.broadcast %87 : vector<1x4x1xf32> to vector<9x4x128xf32>
      %89 = arith.mulf %86, %88 : vector<9x4x128xf32>
      %c0_92 = arith.constant 0 : index
      %c0_93 = arith.constant 0 : index
      %c0_94 = arith.constant 0 : index
      %90 = vector.load %arg9[%c0_92, %c0_93, %c0_94] : memref<9x4x128xf32, #tpu.memory_space<vmem>>, vector<9x4x128xf32>
      tpu.vector_store %arg9[%c0_92, %c0_93, %c0_94], %89 {strides = array<i32>} : memref<9x4x128xf32, #tpu.memory_space<vmem>>, vector<9x4x128xf32>,
    } else {
    }
    %c0 = arith.constant 0 : index
    %c0_1 = arith.constant 0 : index
    %c0_2 = arith.constant 0 : index
    %c0_3 = arith.constant 0 : index
    %c0_4 = arith.constant 0 : index
    %3 = vector.load %arg6[%c0, %c0_1, %c0_2, %c0_3, %c0_4] : memref<1x1x10x18x4xf32, #tpu.memory_space<vmem>>, vector<1x1x8x16x4xf32>
    %4 = vector.shape_cast %3 : vector<1x1x8x16x4xf32> to vector<8x16x4xf32>
    %5 = vector.shape_cast %4 : vector<8x16x4xf32> to vector<128x4xf32>
    %c0_5 = arith.constant 0 : index
    %c0_6 = arith.constant 0 : index
    %c0_7 = arith.constant 0 : index
    %6 = vector.load %arg9[%c0_5, %c0_6, %c0_7] : memref<9x4x128xf32, #tpu.memory_space<vmem>>, vector<1x4x128xf32>
    %7 = vector.shape_cast %6 : vector<1x4x128xf32> to vector<4x128xf32>
    %cst = arith.constant dense<0.000000e+00> : vector<128x128xf32>
    %8 = tpu.matmul %5, %7, %cst {dimension_numbers = #tpu.dot_dimension_numbers<[1], [0], [0], [1], [0, 0, 1, 1], [], []>} : vector<128x4xf32>, vector<4x128xf32>, vector<128x128xf32> -> vector<128x128xf32>
    %c0_8 = arith.constant 0 : index
    %c0_9 = arith.constant 0 : index
    %c0_10 = arith.constant 0 : index
    %c1 = arith.constant 1 : index
    %c0_11 = arith.constant 0 : index
    %9 = vector.load %arg6[%c0_8, %c0_9, %c0_10, %c1, %c0_11] : memref<1x1x10x18x4xf32, #tpu.memory_space<vmem>>, vector<1x1x8x16x4xf32>
    %10 = vector.shape_cast %9 : vector<1x1x8x16x4xf32> to vector<8x16x4xf32>
    %11 = vector.shape_cast %10 : vector<8x16x4xf32> to vector<128x4xf32>
    %c1_12 = arith.constant 1 : index
    %c0_13 = arith.constant 0 : index
    %c0_14 = arith.constant 0 : index
    %12 = vector.load %arg9[%c1_12, %c0_13, %c0_14] : memref<9x4x128xf32, #tpu.memory_space<vmem>>, vector<1x4x128xf32>
    %13 = vector.shape_cast %12 : vector<1x4x128xf32> to vector<4x128xf32>
    %cst_15 = arith.constant dense<0.000000e+00> : vector<128x128xf32>
    %14 = tpu.matmul %11, %13, %cst_15 {dimension_numbers = #tpu.dot_dimension_numbers<[1], [0], [0], [1], [0, 0, 1, 1], [], []>} : vector<128x4xf32>, vector<4x128xf32>, vector<128x128xf32> -> vector<128x128xf32>
    %15 = arith.addf %8, %14 : vector<128x128xf32>
    %c0_16 = arith.constant 0 : index
    %c0_17 = arith.constant 0 : index
    %c0_18 = arith.constant 0 : index
    %c2 = arith.constant 2 : index
    %c0_19 = arith.constant 0 : index
    %16 = vector.load %arg6[%c0_16, %c0_17, %c0_18, %c2, %c0_19] : memref<1x1x10x18x4xf32, #tpu.memory_space<vmem>>, vector<1x1x8x16x4xf32>
    %17 = vector.shape_cast %16 : vector<1x1x8x16x4xf32> to vector<8x16x4xf32>
    %18 = vector.shape_cast %17 : vector<8x16x4xf32> to vector<128x4xf32>
    %c2_20 = arith.constant 2 : index
    %c0_21 = arith.constant 0 : index
    %c0_22 = arith.constant 0 : index
    %19 = vector.load %arg9[%c2_20, %c0_21, %c0_22] : memref<9x4x128xf32, #tpu.memory_space<vmem>>, vector<1x4x128xf32>
    %20 = vector.shape_cast %19 : vector<1x4x128xf32> to vector<4x128xf32>
    %cst_23 = arith.constant dense<0.000000e+00> : vector<128x128xf32>
    %21 = tpu.matmul %18, %20, %cst_23 {dimension_numbers = #tpu.dot_dimension_numbers<[1], [0], [0], [1], [0, 0, 1, 1], [], []>} : vector<128x4xf32>, vector<4x128xf32>, vector<128x128xf32> -> vector<128x128xf32>
    %22 = arith.addf %15, %21 : vector<128x128xf32>
    %c0_24 = arith.constant 0 : index
    %c0_25 = arith.constant 0 : index
    %c1_26 = arith.constant 1 : index
    %c0_27 = arith.constant 0 : index
    %c0_28 = arith.constant 0 : index
    %23 = vector.load %arg6[%c0_24, %c0_25, %c1_26, %c0_27, %c0_28] : memref<1x1x10x18x4xf32, #tpu.memory_space<vmem>>, vector<1x1x8x16x4xf32>
    %24 = vector.shape_cast %23 : vector<1x1x8x16x4xf32> to vector<8x16x4xf32>
    %25 = vector.shape_cast %24 : vector<8x16x4xf32> to vector<128x4xf32>
    %c3 = arith.constant 3 : index
    %c0_29 = arith.constant 0 : index
    %c0_30 = arith.constant 0 : index
    %26 = vector.load %arg9[%c3, %c0_29, %c0_30] : memref<9x4x128xf32, #tpu.memory_space<vmem>>, vector<1x4x128xf32>
    %27 = vector.shape_cast %26 : vector<1x4x128xf32> to vector<4x128xf32>
    %cst_31 = arith.constant dense<0.000000e+00> : vector<128x128xf32>
    %28 = tpu.matmul %25, %27, %cst_31 {dimension_numbers = #tpu.dot_dimension_numbers<[1], [0], [0], [1], [0, 0, 1, 1], [], []>} : vector<128x4xf32>, vector<4x128xf32>, vector<128x128xf32> -> vector<128x128xf32>
    %29 = arith.addf %22, %28 : vector<128x128xf32>
    %c0_32 = arith.constant 0 : index
    %c0_33 = arith.constant 0 : index
    %c1_34 = arith.constant 1 : index
    %c1_35 = arith.constant 1 : index
    %c0_36 = arith.constant 0 : index
    %30 = vector.load %arg6[%c0_32, %c0_33, %c1_34, %c1_35, %c0_36] : memref<1x1x10x18x4xf32, #tpu.memory_space<vmem>>, vector<1x1x8x16x4xf32>
    %31 = vector.shape_cast %30 : vector<1x1x8x16x4xf32> to vector<8x16x4xf32>
    %32 = vector.shape_cast %31 : vector<8x16x4xf32> to vector<128x4xf32>
    %c4 = arith.constant 4 : index
    %c0_37 = arith.constant 0 : index
    %c0_38 = arith.constant 0 : index
    %33 = vector.load %arg9[%c4, %c0_37, %c0_38] : memref<9x4x128xf32, #tpu.memory_space<vmem>>, vector<1x4x128xf32>
    %34 = vector.shape_cast %33 : vector<1x4x128xf32> to vector<4x128xf32>
    %cst_39 = arith.constant dense<0.000000e+00> : vector<128x128xf32>
    %35 = tpu.matmul %32, %34, %cst_39 {dimension_numbers = #tpu.dot_dimension_numbers<[1], [0], [0], [1], [0, 0, 1, 1], [], []>} : vector<128x4xf32>, vector<4x128xf32>, vector<128x128xf32> -> vector<128x128xf32>
    %36 = arith.addf %29, %35 : vector<128x128xf32>
    %c0_40 = arith.constant 0 : index
    %c0_41 = arith.constant 0 : index
    %c1_42 = arith.constant 1 : index
    %c2_43 = arith.constant 2 : index
    %c0_44 = arith.constant 0 : index
    %37 = vector.load %arg6[%c0_40, %c0_41, %c1_42, %c2_43, %c0_44] : memref<1x1x10x18x4xf32, #tpu.memory_space<vmem>>, vector<1x1x8x16x4xf32>
    %38 = vector.shape_cast %37 : vector<1x1x8x16x4xf32> to vector<8x16x4xf32>
    %39 = vector.shape_cast %38 : vector<8x16x4xf32> to vector<128x4xf32>
    %c5 = arith.constant 5 : index
    %c0_45 = arith.constant 0 : index
    %c0_46 = arith.constant 0 : index
    %40 = vector.load %arg9[%c5, %c0_45, %c0_46] : memref<9x4x128xf32, #tpu.memory_space<vmem>>, vector<1x4x128xf32>
    %41 = vector.shape_cast %40 : vector<1x4x128xf32> to vector<4x128xf32>
    %cst_47 = arith.constant dense<0.000000e+00> : vector<128x128xf32>
    %42 = tpu.matmul %39, %41, %cst_47 {dimension_numbers = #tpu.dot_dimension_numbers<[1], [0], [0], [1], [0, 0, 1, 1], [], []>} : vector<128x4xf32>, vector<4x128xf32>, vector<128x128xf32> -> vector<128x128xf32>
    %43 = arith.addf %36, %42 : vector<128x128xf32>
    %c0_48 = arith.constant 0 : index
    %c0_49 = arith.constant 0 : index
    %c2_50 = arith.constant 2 : index
    %c0_51 = arith.constant 0 : index
    %c0_52 = arith.constant 0 : index
    %44 = vector.load %arg6[%c0_48, %c0_49, %c2_50, %c0_51, %c0_52] : memref<1x1x10x18x4xf32, #tpu.memory_space<vmem>>, vector<1x1x8x16x4xf32>
    %45 = vector.shape_cast %44 : vector<1x1x8x16x4xf32> to vector<8x16x4xf32>
    %46 = vector.shape_cast %45 : vector<8x16x4xf32> to vector<128x4xf32>
    %c6 = arith.constant 6 : index
    %c0_53 = arith.constant 0 : index
    %c0_54 = arith.constant 0 : index
    %47 = vector.load %arg9[%c6, %c0_53, %c0_54] : memref<9x4x128xf32, #tpu.memory_space<vmem>>, vector<1x4x128xf32>
    %48 = vector.shape_cast %47 : vector<1x4x128xf32> to vector<4x128xf32>
    %cst_55 = arith.constant dense<0.000000e+00> : vector<128x128xf32>
    %49 = tpu.matmul %46, %48, %cst_55 {dimension_numbers = #tpu.dot_dimension_numbers<[1], [0], [0], [1], [0, 0, 1, 1], [], []>} : vector<128x4xf32>, vector<4x128xf32>, vector<128x128xf32> -> vector<128x128xf32>
    %50 = arith.addf %43, %49 : vector<128x128xf32>
    %c0_56 = arith.constant 0 : index
    %c0_57 = arith.constant 0 : index
    %c2_58 = arith.constant 2 : index
    %c1_59 = arith.constant 1 : index
    %c0_60 = arith.constant 0 : index
    %51 = vector.load %arg6[%c0_56, %c0_57, %c2_58, %c1_59, %c0_60] : memref<1x1x10x18x4xf32, #tpu.memory_space<vmem>>, vector<1x1x8x16x4xf32>
    %52 = vector.shape_cast %51 : vector<1x1x8x16x4xf32> to vector<8x16x4xf32>
    %53 = vector.shape_cast %52 : vector<8x16x4xf32> to vector<128x4xf32>
    %c7 = arith.constant 7 : index
    %c0_61 = arith.constant 0 : index
    %c0_62 = arith.constant 0 : index
    %54 = vector.load %arg9[%c7, %c0_61, %c0_62] : memref<9x4x128xf32, #tpu.memory_space<vmem>>, vector<1x4x128xf32>
    %55 = vector.shape_cast %54 : vector<1x4x128xf32> to vector<4x128xf32>
    %cst_63 = arith.constant dense<0.000000e+00> : vector<128x128xf32>
    %56 = tpu.matmul %53, %55, %cst_63 {dimension_numbers = #tpu.dot_dimension_numbers<[1], [0], [0], [1], [0, 0, 1, 1], [], []>} : vector<128x4xf32>, vector<4x128xf32>, vector<128x128xf32> -> vector<128x128xf32>
    %57 = arith.addf %50, %56 : vector<128x128xf32>
    %c0_64 = arith.constant 0 : index
    %c0_65 = arith.constant 0 : index
    %c2_66 = arith.constant 2 : index
    %c2_67 = arith.constant 2 : index
    %c0_68 = arith.constant 0 : index
    %58 = vector.load %arg6[%c0_64, %c0_65, %c2_66, %c2_67, %c0_68] : memref<1x1x10x18x4xf32, #tpu.memory_space<vmem>>, vector<1x1x8x16x4xf32>
    %59 = vector.shape_cast %58 : vector<1x1x8x16x4xf32> to vector<8x16x4xf32>
    %60 = vector.shape_cast %59 : vector<8x16x4xf32> to vector<128x4xf32>
    %c8 = arith.constant 8 : index
    %c0_69 = arith.constant 0 : index
    %c0_70 = arith.constant 0 : index
    %61 = vector.load %arg9[%c8, %c0_69, %c0_70] : memref<9x4x128xf32, #tpu.memory_space<vmem>>, vector<1x4x128xf32>
    %62 = vector.shape_cast %61 : vector<1x4x128xf32> to vector<4x128xf32>
    %cst_71 = arith.constant dense<0.000000e+00> : vector<128x128xf32>
    %63 = tpu.matmul %60, %62, %cst_71 {dimension_numbers = #tpu.dot_dimension_numbers<[1], [0], [0], [1], [0, 0, 1, 1], [], []>} : vector<128x4xf32>, vector<4x128xf32>, vector<128x128xf32> -> vector<128x128xf32>
    %64 = arith.addf %57, %63 : vector<128x128xf32>
    %c0_72 = arith.constant 0 : index
    %c0_73 = arith.constant 0 : index
    %c0_74 = arith.constant 0 : index
    %65 = vector.load %arg3[%c0_72, %c0_73, %c0_74] : memref<1x1x128xf32, #tpu.memory_space<vmem>>, vector<1x1x128xf32>
    %66 = vector.shape_cast %65 : vector<1x1x128xf32> to vector<1x128xf32>
    %67 = vector.broadcast %66 : vector<1x128xf32> to vector<128x128xf32>
    %68 = arith.mulf %64, %67 : vector<128x128xf32>
    %c0_75 = arith.constant 0 : index
    %c0_76 = arith.constant 0 : index
    %c0_77 = arith.constant 0 : index
    %69 = vector.load %arg7[%c0_75, %c0_76, %c0_77] : memref<1x128x1xf32, #tpu.memory_space<vmem>>, vector<1x128x1xf32>
    %70 = vector.shape_cast %69 : vector<1x128x1xf32> to vector<128x1xf32>
    %71 = vector.broadcast %70 : vector<128x1xf32> to vector<128x128xf32>
    %72 = arith.addf %68, %71 : vector<128x128xf32>
    %c0_78 = arith.constant 0 : index
    %c0_79 = arith.constant 0 : index
    %73 = vector.load %arg4[%c0_78, %c0_79] : memref<1x128xf32, #tpu.memory_space<vmem>>, vector<1x128xf32>
    %74 = vector.broadcast %73 : vector<1x128xf32> to vector<128x128xf32>
    %75 = arith.addf %72, %74 : vector<128x128xf32>
    %cst_80 = arith.constant 0.000000e+00 : f32
    %76 = vector.broadcast %cst_80 : f32 to vector<128x128xf32>
    %77 = arith.cmpf oge, %75, %76 : vector<128x128xf32>
    %cst_81 = arith.constant 2.000000e-01 : f32
    %78 = vector.broadcast %cst_81 : f32 to vector<128x128xf32>
    %79 = arith.mulf %78, %75 : vector<128x128xf32>
    %80 = arith.select %77, %75, %79 : vector<128x128xi1>, vector<128x128xf32>
    %cst_82 = arith.constant 1.41421354 : f32
    %81 = vector.broadcast %cst_82 : f32 to vector<128x128xf32>
    %82 = arith.mulf %80, %81 : vector<128x128xf32>
    %c0_83 = arith.constant 0 : index
    %c0_84 = arith.constant 0 : index
    %c0_85 = arith.constant 0 : index
    %83 = vector.load %arg8[%c0_83, %c0_84, %c0_85] : memref<1x128x128xf32, #tpu.memory_space<vmem>>, vector<1x128x128xf32>
    %84 = vector.shape_cast %83 : vector<1x128x128xf32> to vector<128x128xf32>
    %85 = vector.shape_cast %82 : vector<128x128xf32> to vector<1x128x128xf32>
    tpu.vector_store %arg8[%c0_83, %c0_84, %c0_85], %85 {strides = array<i32>} : memref<1x128x128xf32, #tpu.memory_space<vmem>>, vector<1x128x128xf32>,
    return
  }
  func.func @transform_0(%arg0: i32, %arg1: i32) -> (i32, i32, i32) {
    %c0_i32 = arith.constant 0 : i32
    %c0_i32_0 = arith.constant 0 : i32
    %c0_i32_1 = arith.constant 0 : i32
    return %arg0, %c0_i32, %c0_i32_0 : i32, i32, i32
  }
  func.func @transform_1(%arg0: i32, %arg1: i32) -> (i32, i32, i32) {
    %c0_i32 = arith.constant 0 : i32
    %c0_i32_0 = arith.constant 0 : i32
    %c0_i32_1 = arith.constant 0 : i32
    return %arg0, %c0_i32, %c0_i32_0 : i32, i32, i32
  }
  func.func @transform_2(%arg0: i32, %arg1: i32) -> (i32, i32) {
    %c0_i32 = arith.constant 0 : i32
    %c0_i32_0 = arith.constant 0 : i32
    %c0_i32_1 = arith.constant 0 : i32
    return %c0_i32, %c0_i32_0 : i32, i32
  }
  func.func @transform_3(%arg0: i32, %arg1: i32) -> (i32, i32, i32) {
    %c0_i32 = arith.constant 0 : i32
    %c0_i32_0 = arith.constant 0 : i32
    %c0_i32_1 = arith.constant 0 : i32
    %c0_i32_2 = arith.constant 0 : i32
    return %c0_i32, %c0_i32_0, %c0_i32_1 : i32, i32, i32
  }
  func.func @transform_4(%arg0: i32, %arg1: i32) -> (i32, i32, i32, i32, i32) {
    %c0_i32 = arith.constant 0 : i32
    %c0_i32_0 = arith.constant 0 : i32
    %c0_i32_1 = arith.constant 0 : i32
    %c0_i32_2 = arith.constant 0 : i32
    return %arg0, %arg1, %c0_i32, %c0_i32_0, %c0_i32_1 : i32, i32, i32, i32, i32
  }
  func.func @transform_5(%arg0: i32, %arg1: i32) -> (i32, i32, i32) {
    %c0_i32 = arith.constant 0 : i32
    %c0_i32_0 = arith.constant 0 : i32
    return %arg0, %arg1, %c0_i32 : i32, i32, i32
  }
  func.func @transform_6(%arg0: i32, %arg1: i32) -> (i32, i32, i32) {
    %c0_i32 = arith.constant 0 : i32
    %c0_i32_0 = arith.constant 0 : i32
    return %arg0, %arg1, %c0_i32 : i32, i32, i32
  }
}

</mosaic_0001>

<llo_original>
// kernel: tpu_custom_call.1
$region0: #{tpu_custom_call.1}
  #allocation0 [shape = 'u32[]', space=smem, size = 0x4, offset = 0x4, fixed_abs, tag = 'smem constant byte address 0x4 - core index']
  #allocation1 [shape = 'u32[144,128]{1,0:T(1,128)}', space=vmem, size = 0x12000, scoped, tag = 'internal scratch']
  #allocation2 [shape = 'f32[9,4,128]{2,1,0:T(4,128)}', space=vmem, size = 0x4800, scoped, tag = 'scratch operand']
  %s0 = inlined_call_operand.vmem [shape: f32[2,4,1], index: 0, kind: input, shape index: {}]
  %s1 = inlined_call_operand.vmem [shape: f32[2,1,128], index: 1, kind: input, shape index: {}]
  %s2 = inlined_call_operand.vmem [shape: f32[1,128], index: 2, kind: input, shape index: {}]
  %s3 = inlined_call_operand.vmem [shape: f32[9,4,128], index: 3, kind: input, shape index: {}]
  %s4 = inlined_call_operand.vmem [shape: f32[2,2,10,18,4], index: 4, kind: input, shape index: {}]
  %s5 = inlined_call_operand.vmem [shape: f32[2,256,1], index: 5, kind: input, shape index: {}]
  %s6 = inlined_call_operand.hbm [shape: f32[2,256,128], index: 6, kind: output, shape index: {}]
  %s7 = sld [smem:[#allocation0]]
  $region61: #{tpu_custom_call.1} parent=0
    _
  %s9 = ssub.s32 1, %s7
  %s10 = scalar_select 0, %s9, %s7
  $region1: #{tpu_custom_call.1} parent=0
    #allocation3 [shape = 'u8[131072]{0}', space=vmem, size = 0x20000, scoped, tag = 'output window, operand 0']
    #allocation4 [shape = 's32[2]{0}', space=sflag, size = 0x8, scoped, tag = 'scoped memory for tpu_custom_call.1']
    %11 = vsyncpa [#allocation4], 0
    %s12 = scalar_lea.sflag [#allocation4], 1
    %13 = vsyncpa %s12, 0
    loop: start=0, step=1, limit=6
    $region2: #{tpu_custom_call.1} parent=1 // loop_pre_header
      _
    $region3: #{tpu_custom_call.1} parent=1 // loop_header
      %s15 = sphi 0, %s19
      %p16 = scmp.ge.s32.totalorder %s15, 6
      %s22 = sphi 0, %s34
      %s23 = sphi 0, %s30
      %s24 = sphi 0, %s22
      %s25 = sphi 0, %s23
      %s26 = sphi 0, %s24
      %s27 = sphi 0, %s25
      %s37 = sphi 0, %s39
      %s40 = sphi 0, %s37
      %s41 = sphi 0, %s40
      %s57 = sphi 0, %s41
      %s63 = sphi 0, %s65
      %s66 = sphi 0, %s63
      %s67 = sphi 0, %s66
      %s83 = sphi 0, %s67
      %s87 = sphi 0, %s87
      %s89 = sphi 0, %s87
      %s90 = sphi 0, %s89
      %s104 = sphi 0, %s90
      %s108 = sphi 0, %s108
      %s110 = sphi 0, %s108
      %s111 = sphi 0, %s110
      %s125 = sphi 0, %s111
      %s133 = sphi 0, %s135
      %s136 = sphi 0, %s133
      %s137 = sphi 0, %s136
      %s153 = sphi 0, %s137
      %s161 = sphi 0, %s163
      %s164 = sphi 0, %s161
      %s165 = sphi 0, %s164
      %s181 = sphi 0, %s165
      %s189 = sphi 0, %s191
      %s192 = sphi 0, %s189
      %s193 = sphi 0, %s192
      %s209 = sphi 0, %s193
    $region4: #{tpu_custom_call.1} parent=1 // loop_header_branch
      %18 = sbr.rel (%p16) target = $region8
    $region5: #{tpu_custom_call.1} parent=1 // loop_body
      %s20 = ssub.s32 %s15, 1
      %s21 = ssub.s32 %s15, 2
      %s28 = sadd.s32 1, %s23
      %p29 = scmp.ge.s32.totalorder %s28, 2
      %s30 = scalar_select %p29, 0, %s28
      %s31 = sadd.s32 1, %s22
      %s32 = scalar_select %p29, %s31, %s22
      %p33 = scmp.ge.s32.totalorder %s32, 2
      %s34 = scalar_select %p33, 0, %s32
      %s35 = ssub.s32 %s22, %s34
      %p36 = scmp.eq.s32.totalorder %s35, 0
      %s38 = sadd.s32 %s37, 1
      %s39 = scalar_select %p36, %s37, %s38
      %p42 = pneg %p36
      %p43 = scmp.eq.s32.totalorder %s15, 3
      %p44 = por %p42, %p43
      %p45 = scmp.ne.s32.totalorder %s37, %s40
      %p46 = scmp.eq.s32.totalorder %s15, 0
      %p47 = por %p45, %p46
      %p48 = scmp.ne.s32.totalorder %s37, %s40
      %p49 = scmp.eq.s32.totalorder %s20, 3
      %p50 = por %p48, %p49
      %p51 = scmp.ne.s32.totalorder %s40, %s41
      %p52 = scmp.eq.s32.totalorder %s20, 0
      %p53 = por %p51, %p52
      %p54 = scmp.ne.s32.totalorder %s40, %s41
      %p55 = scmp.eq.s32.totalorder %s21, 3
      %p56 = por %p54, %p55
      %p58 = scmp.ne.s32.totalorder %s41, %s57
      %p59 = scmp.eq.s32.totalorder %s21, 0
      %p60 = por %p58, %p59
      %s61 = ssub.s32 %s22, %s34
      %p62 = scmp.eq.s32.totalorder %s61, 0
      %s64 = sadd.s32 %s63, 1
      %s65 = scalar_select %p62, %s63, %s64
      %p68 = pneg %p62
      %p69 = scmp.eq.s32.totalorder %s15, 3
      %p70 = por %p68, %p69
      %p71 = scmp.ne.s32.totalorder %s63, %s66
      %p72 = scmp.eq.s32.totalorder %s15, 0
      %p73 = por %p71, %p72
      %p74 = scmp.ne.s32.totalorder %s63, %s66
      %p75 = scmp.eq.s32.totalorder %s20, 3
      %p76 = por %p74, %p75
      %p77 = scmp.ne.s32.totalorder %s66, %s67
      %p78 = scmp.eq.s32.totalorder %s20, 0
      %p79 = por %p77, %p78
      %p80 = scmp.ne.s32.totalorder %s66, %s67
      %p81 = scmp.eq.s32.totalorder %s21, 3
      %p82 = por %p80, %p81
      %p84 = scmp.ne.s32.totalorder %s67, %s83
      %p85 = scmp.eq.s32.totalorder %s21, 0
      %p86 = por %p84, %p85
      %s88 = sadd.s32 %s87, 1
      %p91 = scmp.eq.s32.totalorder %s15, 3
      %p92 = scmp.ne.s32.totalorder %s87, %s89
      %p93 = scmp.eq.s32.totalorder %s15, 0
      %p94 = por %p92, %p93
      %p95 = scmp.ne.s32.totalorder %s87, %s89
      %p96 = scmp.eq.s32.totalorder %s20, 3
      %p97 = por %p95, %p96
      %p98 = scmp.ne.s32.totalorder %s89, %s90
      %p99 = scmp.eq.s32.totalorder %s20, 0
      %p100 = por %p98, %p99
      %p101 = scmp.ne.s32.totalorder %s89, %s90
      %p102 = scmp.eq.s32.totalorder %s21, 3
      %p103 = por %p101, %p102
      %p105 = scmp.ne.s32.totalorder %s90, %s104
      %p106 = scmp.eq.s32.totalorder %s21, 0
      %p107 = por %p105, %p106
      %s109 = sadd.s32 %s108, 1
      %p112 = scmp.eq.s32.totalorder %s15, 3
      %p113 = scmp.ne.s32.totalorder %s108, %s110
      %p114 = scmp.eq.s32.totalorder %s15, 0
      %p115 = por %p113, %p114
      %p116 = scmp.ne.s32.totalorder %s108, %s110
      %p117 = scmp.eq.s32.totalorder %s20, 3
      %p118 = por %p116, %p117
      %p119 = scmp.ne.s32.totalorder %s110, %s111
      %p120 = scmp.eq.s32.totalorder %s20, 0
      %p121 = por %p119, %p120
      %p122 = scmp.ne.s32.totalorder %s110, %s111
      %p123 = scmp.eq.s32.totalorder %s21, 3
      %p124 = por %p122, %p123
      %p126 = scmp.ne.s32.totalorder %s111, %s125
      %p127 = scmp.eq.s32.totalorder %s21, 0
      %p128 = por %p126, %p127
      %s129 = ssub.s32 %s22, %s34
      %s130 = ssub.s32 %s23, %s30
      %s131 = sor.u32 %s129, %s130
      %p132 = scmp.eq.s32.totalorder %s131, 0
      %s134 = sadd.s32 %s133, 1
      %s135 = scalar_select %p132, %s133, %s134
      %p138 = pneg %p132
      %p139 = scmp.eq.s32.totalorder %s15, 3
      %p140 = por %p138, %p139
      %p141 = scmp.ne.s32.totalorder %s133, %s136
      %p142 = scmp.eq.s32.totalorder %s15, 0
      %p143 = por %p141, %p142
      %p144 = scmp.ne.s32.totalorder %s133, %s136
      %p145 = scmp.eq.s32.totalorder %s20, 3
      %p146 = por %p144, %p145
      %p147 = scmp.ne.s32.totalorder %s136, %s137
      %p148 = scmp.eq.s32.totalorder %s20, 0
      %p149 = por %p147, %p148
      %p150 = scmp.ne.s32.totalorder %s136, %s137
      %p151 = scmp.eq.s32.totalorder %s21, 3
      %p152 = por %p150, %p151
      %p154 = scmp.ne.s32.totalorder %s137, %s153
      %p155 = scmp.eq.s32.totalorder %s21, 0
      %p156 = por %p154, %p155
      %s157 = ssub.s32 %s22, %s34
      %s158 = ssub.s32 %s23, %s30
      %s159 = sor.u32 %s157, %s158
      %p160 = scmp.eq.s32.totalorder %s159, 0
      %s162 = sadd.s32 %s161, 1
      %s163 = scalar_select %p160, %s161, %s162
      %p166 = pneg %p160
      %p167 = scmp.eq.s32.totalorder %s15, 3
      %p168 = por %p166, %p167
      %p169 = scmp.ne.s32.totalorder %s161, %s164
      %p170 = scmp.eq.s32.totalorder %s15, 0
      %p171 = por %p169, %p170
      %p172 = scmp.ne.s32.totalorder %s161, %s164
      %p173 = scmp.eq.s32.totalorder %s20, 3
      %p174 = por %p172, %p173
      %p175 = scmp.ne.s32.totalorder %s164, %s165
      %p176 = scmp.eq.s32.totalorder %s20, 0
      %p177 = por %p175, %p176
      %p178 = scmp.ne.s32.totalorder %s164, %s165
      %p179 = scmp.eq.s32.totalorder %s21, 3
      %p180 = por %p178, %p179
      %p182 = scmp.ne.s32.totalorder %s165, %s181
      %p183 = scmp.eq.s32.totalorder %s21, 0
      %p184 = por %p182, %p183
      %s185 = ssub.s32 %s22, %s34
      %s186 = ssub.s32 %s23, %s30
      %s187 = sor.u32 %s185, %s186
      %p188 = scmp.eq.s32.totalorder %s187, 0
      %s190 = sadd.s32 %s189, 1
      %s191 = scalar_select %p188, %s189, %s190
      %p194 = pneg %p188
      %p195 = scmp.eq.s32.totalorder %s15, 3
      %p196 = por %p194, %p195
      %p197 = scmp.ne.s32.totalorder %s189, %s192
      %p198 = scmp.eq.s32.totalorder %s15, 0
      %p199 = por %p197, %p198
      %p200 = scmp.ne.s32.totalorder %s189, %s192
      %p201 = scmp.eq.s32.totalorder %s20, 3
      %p202 = por %p200, %p201
      %p203 = scmp.ne.s32.totalorder %s192, %s193
      %p204 = scmp.eq.s32.totalorder %s20, 0
      %p205 = por %p203, %p204
      %p206 = scmp.ne.s32.totalorder %s192, %s193
      %p207 = scmp.eq.s32.totalorder %s21, 3
      %p208 = por %p206, %p207
      %p210 = scmp.ne.s32.totalorder %s193, %s209
      %p211 = scmp.eq.s32.totalorder %s21, 0
      %p212 = por %p210, %p211
      %p213 = scmp.le.s32.totalorder 1, %s15
      %p214 = scmp.lt.s32.totalorder %s15, 5
      %p215 = pnand %p213, %p214
      %p216 = pneg %p215
      // Predicated region
      $region9: #{tpu_custom_call.1} parent=5 // pred_check
        _
      $region10: #{tpu_custom_call.1} parent=5 // pred_check_branch
        %218 = sbr.rel (%p215) target = $region12
      $region11: #{tpu_custom_call.1} parent=5 // pred_region
        %s219 = ssub.s32 %s15, 1
        // Predicated region
        $region13: #{tpu_custom_call.1} parent=11 // pred_check
          %p220 = pneg %p100
        $region14: #{tpu_custom_call.1} parent=11 // pred_check_branch
          %222 = sbr.rel (%p220) target = $region16
        $region15: #{tpu_custom_call.1} parent=11 // pred_region
          _
        $region16: #{tpu_custom_call.1} parent=11 // pred_fallthru
          _
        // Predicated region
        $region17: #{tpu_custom_call.1} parent=11 // pred_check
          %p223 = pneg %p121
        $region18: #{tpu_custom_call.1} parent=11 // pred_check_branch
          %225 = sbr.rel (%p223) target = $region20
        $region19: #{tpu_custom_call.1} parent=11 // pred_region
          _
        $region20: #{tpu_custom_call.1} parent=11 // pred_fallthru
          _
      $region12: #{tpu_custom_call.1} parent=5 // pred_fallthru
        _
      %p226 = scmp.lt.s32.totalorder %s15, 4
      // Predicated region
      $region21: #{tpu_custom_call.1} parent=5 // pred_check
        %p227 = pneg %p226
      $region22: #{tpu_custom_call.1} parent=5 // pred_check_branch
        %229 = sbr.rel (%p227) target = $region24
      $region23: #{tpu_custom_call.1} parent=5 // pred_region
        // Predicated region
        $region25: #{tpu_custom_call.1} parent=23 // pred_check
          %p230 = pneg %p47
        $region26: #{tpu_custom_call.1} parent=23 // pred_check_branch
          %232 = sbr.rel (%p230) target = $region28
        $region27: #{tpu_custom_call.1} parent=23 // pred_region
          %p233 = scmp.lt.s32.totalorder %s22, 1
          %s234 = scalar_select %p233, %s22, 1
          %s235 = smul.addr %s234, 4
          %s236 = scalar_lea.vmem %s0, %s235
        $region28: #{tpu_custom_call.1} parent=23 // pred_fallthru
          _
        // Predicated region
        $region29: #{tpu_custom_call.1} parent=23 // pred_check
          %p237 = pneg %p73
        $region30: #{tpu_custom_call.1} parent=23 // pred_check_branch
          %239 = sbr.rel (%p237) target = $region32
        $region31: #{tpu_custom_call.1} parent=23 // pred_region
          %p240 = scmp.lt.s32.totalorder %s22, 1
          %s241 = scalar_select %p240, %s22, 1
          %s242 = scalar_lea.vmem %s1, %s241
        $region32: #{tpu_custom_call.1} parent=23 // pred_fallthru
          _
        // Predicated region
        $region33: #{tpu_custom_call.1} parent=23 // pred_check
          %p243 = pneg %p143
        $region34: #{tpu_custom_call.1} parent=23 // pred_check_branch
          %245 = sbr.rel (%p243) target = $region36
        $region35: #{tpu_custom_call.1} parent=23 // pred_region
          %p246 = scmp.lt.s32.totalorder %s22, 1
          %s247 = scalar_select %p246, %s22, 1
          %p248 = scmp.lt.s32.totalorder %s23, 1
          %s249 = scalar_select %p248, %s23, 1
          %s250 = smul.addr %s249, 30
          %s251 = smul.addr %s247, 60
          %s252 = sadd.s32 %s250, %s251
          %s253 = smul.addr %s252, 8
          %s254 = scalar_lea.vmem %s4, %s253
        $region36: #{tpu_custom_call.1} parent=23 // pred_fallthru
          _
        // Predicated region
        $region37: #{tpu_custom_call.1} parent=23 // pred_check
          %p255 = pneg %p171
        $region38: #{tpu_custom_call.1} parent=23 // pred_check_branch
          %257 = sbr.rel (%p255) target = $region40
        $region39: #{tpu_custom_call.1} parent=23 // pred_region
          %s258 = smul.u32 16, %s23
          %p259 = scmp.lt.s32.totalorder %s22, 1
          %s260 = scalar_select %p259, %s22, 1
          %p261 = scmp.lt.s32.totalorder %s258, 31
          %s262 = scalar_select %p261, %s258, 31
          %s263 = smul.addr %s260, 32
          %s264 = sadd.s32 %s262, %s263
          %s265 = smul.addr %s264, 8
          %s266 = scalar_lea.vmem %s5, %s265
          %s267 = smul.u32 16, %s23
        $region40: #{tpu_custom_call.1} parent=23 // pred_fallthru
          _
      $region24: #{tpu_custom_call.1} parent=5 // pred_fallthru
        _
      %p268 = scmp.le.s32.totalorder 1, %s15
      %p269 = scmp.lt.s32.totalorder %s15, 5
      %p270 = pnand %p268, %p269
      %p271 = pneg %p270
      // Predicated region
      $region41: #{tpu_custom_call.1} parent=5 // pred_check
        _
      $region42: #{tpu_custom_call.1} parent=5 // pred_check_branch
        %273 = sbr.rel (%p270) target = $region44
      $region43: #{tpu_custom_call.1} parent=5 // pred_region
        %s274 = ssub.s32 %s15, 1
        %p275 = scmp.lt.s32.totalorder %s24, 1
        %s276 = scalar_select %p275, %s24, 1
        %s277 = smul.addr %s276, 4
        %s278 = scalar_lea.vmem %s0, %s277
        %p279 = pneg %p53
        %p280 = pneg %p50
        %p281 = scmp.lt.s32.totalorder %s24, 1
        %s282 = scalar_select %p281, %s24, 1
        %s283 = scalar_lea.vmem %s1, %s282
        %p284 = pneg %p79
        %p285 = pneg %p76
        %p286 = pneg %p100
        %p287 = pneg %p97
        %p288 = pneg %p121
        %p289 = pneg %p118
        %p290 = scmp.lt.s32.totalorder %s24, 1
        %s291 = scalar_select %p290, %s24, 1
        %p292 = scmp.lt.s32.totalorder %s25, 1
        %s293 = scalar_select %p292, %s25, 1
        %s294 = smul.addr %s293, 30
        %s295 = smul.addr %s291, 60
        %s296 = sadd.s32 %s294, %s295
        %s297 = smul.addr %s296, 8
        %s298 = scalar_lea.vmem %s4, %s297
        %p299 = pneg %p149
        %p300 = pneg %p146
        %s301 = smul.u32 16, %s25
        %p302 = scmp.lt.s32.totalorder %s24, 1
        %s303 = scalar_select %p302, %s24, 1
        %p304 = scmp.lt.s32.totalorder %s301, 31
        %s305 = scalar_select %p304, %s301, 31
        %s306 = smul.addr %s303, 32
        %s307 = sadd.s32 %s305, %s306
        %s308 = smul.addr %s307, 8
        %s309 = scalar_lea.vmem %s5, %s308
        %p310 = pneg %p177
        %p311 = pneg %p174
        %p312 = pneg %p205
        %p313 = pneg %p202
        %s314 = sand.u32 %s192, 1
        %s315 = scalar_lea.sflag [#allocation4], %s314
        %s316 = sand.u32 %s192, 1
        %s317 = smul.addr %s316, 128
        %s318 = scalar_lea.vmem [#allocation3], %s317
        %p319 = scmp.lt.s32.totalorder %s24, 1
        %s320 = scalar_select %p319, %s24, 1
        %s321 = smul.addr %s320, 4
        %s322 = scalar_lea.vmem %s0, %s321
        %p323 = scmp.lt.s32.totalorder %s24, 1
        %s324 = scalar_select %p323, %s24, 1
        %s325 = scalar_lea.vmem %s1, %s324
        %p326 = scmp.lt.s32.totalorder %s24, 1
        %s327 = scalar_select %p326, %s24, 1
        %p328 = scmp.lt.s32.totalorder %s25, 1
        %s329 = scalar_select %p328, %s25, 1
        %s330 = smul.addr %s329, 30
        %s331 = smul.addr %s327, 60
        %s332 = sadd.s32 %s330, %s331
        %s333 = smul.addr %s332, 8
        %s334 = scalar_lea.vmem %s4, %s333
        %s335 = smul.u32 16, %s25
        %p336 = scmp.lt.s32.totalorder %s24, 1
        %s337 = scalar_select %p336, %s24, 1
        %p338 = scmp.lt.s32.totalorder %s335, 31
        %s339 = scalar_select %p338, %s335, 31
        %s340 = smul.addr %s337, 32
        %s341 = sadd.s32 %s339, %s340
        %s342 = smul.addr %s341, 8
        %s343 = scalar_lea.vmem %s5, %s342
        %s344 = smul.u32 16, %s25
        %s345 = smul.u32 16, %s25
        %p346 = scmp.eq.s32.totalorder %s25, 0
        // Predicated region
        $region45: #{tpu_custom_call.1} parent=43 // pred_check
          %p347 = pneg %p346
        $region46: #{tpu_custom_call.1} parent=43 // pred_check_branch
          %349 = sbr.rel (%p347) target = $region48
        $region47: #{tpu_custom_call.1} parent=43 // pred_region
          %v350 = vld [vmem:[%s3] sm:$0xf]
          %v351 = vld [vmem:[%s3 + $0x4] sm:$0xf]
          %v352 = vld [vmem:[%s3 + $0x8] sm:$0xf]
          %v353 = vld [vmem:[%s3 + $0xc] sm:$0xf]
          %v354 = vld [vmem:[%s3 + $0x10] sm:$0xf]
          %v355 = vld [vmem:[%s3 + $0x14] sm:$0xf]
          %v356 = vld [vmem:[%s3 + $0x18] sm:$0xf]
          %v357 = vld [vmem:[%s3 + $0x1c] sm:$0xf]
          %v358 = vld [vmem:[%s3 + $0x20] sm:$0xf]
          %v359 = vld [vmem:[%s322] sm:$0xf]
          %361 = vset.pattern.permute.xlu0 0
          %362 = vperm.xlu0 %361, %v359
          %v363 = vpop.permute.xlu0 %362
          %v365 = vmul.f32 %v350, %v363
          %v366 = vmul.f32 %v351, %v363
          %v367 = vmul.f32 %v352, %v363
          %v368 = vmul.f32 %v353, %v363
          %v369 = vmul.f32 %v354, %v363
          %v370 = vmul.f32 %v355, %v363
          %v371 = vmul.f32 %v356, %v363
          %v372 = vmul.f32 %v357, %v363
          %v373 = vmul.f32 %v358, %v363
          %374 = vst [vmem:[#allocation2] sm:$0xf] %v365
          %375 = vst [vmem:[#allocation2 + $0x4] sm:$0xf] %v366
          %376 = vst [vmem:[#allocation2 + $0x8] sm:$0xf] %v367
          %377 = vst [vmem:[#allocation2 + $0xc] sm:$0xf] %v368
          %378 = vst [vmem:[#allocation2 + $0x10] sm:$0xf] %v369
          %379 = vst [vmem:[#allocation2 + $0x14] sm:$0xf] %v370
          %380 = vst [vmem:[#allocation2 + $0x18] sm:$0xf] %v371
          %381 = vst [vmem:[#allocation2 + $0x1c] sm:$0xf] %v372
          %382 = vst [vmem:[#allocation2 + $0x20] sm:$0xf] %v373
        $region48: #{tpu_custom_call.1} parent=43 // pred_fallthru
          _
        %v383 = vld [vmem:[%s334] sm:$0xff]
        %v384 = vld [vmem:[%s334 + $0x8] sm:$0xff]
        %v385 = vld [vmem:[%s334 + $0x18] sm:$0xff]
        %v386 = vld [vmem:[%s334 + $0x20] sm:$0xff]
        %v387 = vld [vmem:[%s334 + $0x30] sm:$0xff]
        %v388 = vld [vmem:[%s334 + $0x38] sm:$0xff]
        %v389 = vld [vmem:[%s334 + $0x48] sm:$0xff]
        %v390 = vld [vmem:[%s334 + $0x50] sm:$0xff]
        %v391 = vld [vmem:[%s334 + $0x60] sm:$0xff]
        %v392 = vld [vmem:[%s334 + $0x68] sm:$0xff]
        %v393 = vld [vmem:[%s334 + $0x78] sm:$0xff]
        %v394 = vld [vmem:[%s334 + $0x80] sm:$0xff]
        %v395 = vld [vmem:[%s334 + $0x90] sm:$0xff]
        %v396 = vld [vmem:[%s334 + $0x98] sm:$0xff]
        %v397 = vld [vmem:[%s334 + $0xa8] sm:$0xff]
        %v398 = vld [vmem:[%s334 + $0xb0] sm:$0xff]
        %v399 = vld [vmem:[#allocation2] sm:$0xf]
        %v400 = vld [vmem:[%s334 + $0x1] sm:$0xff]
        %v401 = vld [vmem:[%s334 + $0x9] sm:$0xff]
        %v402 = vld [vmem:[%s334 + $0x19] sm:$0xff]
        %v403 = vld [vmem:[%s334 + $0x21] sm:$0xff]
        %v404 = vld [vmem:[%s334 + $0x31] sm:$0xff]
        %v405 = vld [vmem:[%s334 + $0x39] sm:$0xff]
        %v406 = vld [vmem:[%s334 + $0x49] sm:$0xff]
        %v407 = vld [vmem:[%s334 + $0x51] sm:$0xff]
        %v408 = vld [vmem:[%s334 + $0x61] sm:$0xff]
        %v409 = vld [vmem:[%s334 + $0x69] sm:$0xff]
        %v410 = vld [vmem:[%s334 + $0x79] sm:$0xff]
        %v411 = vld [vmem:[%s334 + $0x81] sm:$0xff]
        %v412 = vld [vmem:[%s334 + $0x91] sm:$0xff]
        %v413 = vld [vmem:[%s334 + $0x99] sm:$0xff]
        %v414 = vld [vmem:[%s334 + $0xa9] sm:$0xff]
        %v415 = vld [vmem:[%s334 + $0xb1] sm:$0xff]
        %s416 = scalar_lea.vmem [#allocation2], 4
        %v417 = vld [vmem:[%s416] sm:$0xf]
        %vm418 = vcmask 31744
        %v420 = vsel %vm418, %v400, 0
        %v423 = vsel %vm418, %v401, 0
        %v426 = vsel %vm418, %v402, 0
        %v429 = vsel %vm418, %v403, 0
        %v432 = vsel %vm418, %v404, 0
        %v435 = vsel %vm418, %v405, 0
        %v438 = vsel %vm418, %v406, 0
        %v441 = vsel %vm418, %v407, 0
        %v444 = vsel %vm418, %v408, 0
        %v447 = vsel %vm418, %v409, 0
        %v450 = vsel %vm418, %v410, 0
        %v453 = vsel %vm418, %v411, 0
        %v456 = vsel %vm418, %v412, 0
        %v459 = vsel %vm418, %v413, 0
        %v462 = vsel %vm418, %v414, 0
        %v465 = vsel %vm418, %v415, 0
        %vm467 = vcmask 1043456
        %v469 = vsel %vm467, %v417, 0
        %471 = vmatprep.subr.mxu0 0.0
        %472 = vmatpush1.msra.mxu0 %v469
        %473 = vmatprep.subr.mxu0 0.0
        %474 = vmatpush1.msra.mxu0 0.0
        %475 = vmatprep.subr.mxu0 0.0
        %476 = vmatpush1.msra.mxu0 0.0
        %477 = vmatprep.subr.mxu0 0.0
        %478 = vmatpush1.msra.mxu0 0.0
        %479 = vmatprep.subr.mxu0 0.0
        %480 = vmatpush1.msra.mxu0 0.0
        %481 = vmatprep.subr.mxu0 0.0
        %482 = vmatpush1.msra.mxu0 0.0
        %483 = vmatprep.subr.mxu0 0.0
        %484 = vmatpush1.msra.mxu0 0.0
        %485 = vmatprep.subr.mxu0 0.0
        %486 = vmatpush1.msra.mxu0 0.0
        %487 = vmatprep.subr.mxu0 0.0
        %488 = vmatpush1.msra.mxu0 0.0
        %489 = vmatprep.subr.mxu0 0.0
        %490 = vmatpush1.msra.mxu0 0.0
        %491 = vmatprep.subr.mxu0 0.0
        %492 = vmatpush1.msra.mxu0 0.0
        %493 = vmatprep.subr.mxu0 0.0
        %494 = vmatpush1.msra.mxu0 0.0
        %495 = vmatprep.subr.mxu0 0.0
        %496 = vmatpush1.msra.mxu0 0.0
        %497 = vmatprep.subr.mxu0 0.0
        %498 = vmatpush1.msra.mxu0 0.0
        %499 = vmatprep.subr.mxu0 0.0
        %500 = vmatpush1.msra.mxu0 0.0
        %501 = vmatprep.subr.mxu0 0.0
        %502 = vmatpush1.msra.mxu0 0.0
        %503 = vmatprep.subr.mxu0 0.0
        %504 = vmatpush1.msra.mxu0 0.0
        %505 = vmatprep.subr.mxu0 0.0
        %506 = vmatpush1.msra.mxu0 0.0
        %507 = vmatprep.subr.mxu0 0.0
        %508 = vmatpush1.msra.mxu0 0.0
        %509 = vmatprep.subr.mxu0 0.0
        %510 = vmatpush1.msra.mxu0 0.0
        %511 = vmatprep.subr.mxu0 0.0
        %512 = vmatpush1.msra.mxu0 0.0
        %513 = vmatprep.subr.mxu0 0.0
        %514 = vmatpush1.msra.mxu0 0.0
        %515 = vmatprep.subr.mxu0 0.0
        %516 = vmatpush1.msra.mxu0 0.0
        %517 = vmatprep.subr.mxu0 0.0
        %518 = vmatpush1.msra.mxu0 0.0
        %519 = vmatprep.subr.mxu0 0.0
        %520 = vmatpush1.msra.mxu0 0.0
        %521 = vmatprep.subr.mxu0 0.0
        %522 = vmatpush1.msra.mxu0 0.0
        %523 = vmatprep.subr.mxu0 0.0
        %524 = vmatpush1.msra.mxu0 0.0
        %525 = vmatprep.subr.mxu0 0.0
        %526 = vmatpush1.msra.mxu0 0.0
        %527 = vmatprep.subr.mxu0 0.0
        %528 = vmatpush1.msra.mxu0 0.0
        %529 = vmatprep.subr.mxu0 0.0
        %530 = vmatpush1.msra.mxu0 0.0
        %531 = vmatprep.subr.mxu0 0.0
        %532 = vmatpush1.msra.mxu0 0.0
        %533 = vmatprep.subr.mxu0 0.0
        %534 = vmatpush1.msra.mxu0 0.0
        %535 = vmatprep.mubr.f32.mxu0 0.0
        %536 = vmatmul.mubr.f32.gmra.mrb[0].mxu0 %v420
        %v537 = vpop.f32.mrb[0].mxu0
        %v538 = vadd.f32 0.0, %v537
        %v539 = vpop.f32.mrb[0].mxu0
        %540 = vmatprep.mubr.f32.mxu0 0.0
        %541 = vmatmul.mubr.f32.gmra.mrb[0].mxu0 %v423
        %v542 = vpop.f32.mrb[0].mxu0
        %v543 = vadd.f32 0.0, %v542
        %v544 = vpop.f32.mrb[0].mxu0
        %545 = vmatprep.mubr.f32.mxu0 0.0
        %546 = vmatmul.mubr.f32.gmra.mrb[0].mxu0 %v426
        %v547 = vpop.f32.mrb[0].mxu0
        %v548 = vadd.f32 0.0, %v547
        %v549 = vpop.f32.mrb[0].mxu0
        %550 = vmatprep.mubr.f32.mxu0 0.0
        %551 = vmatmul.mubr.f32.gmra.mrb[0].mxu0 %v429
        %v552 = vpop.f32.mrb[0].mxu0
        %v553 = vadd.f32 0.0, %v552
        %v554 = vpop.f32.mrb[0].mxu0
        %555 = vmatprep.mubr.f32.mxu0 0.0
        %556 = vmatmul.mubr.f32.gmra.mrb[0].mxu0 %v432
        %v557 = vpop.f32.mrb[0].mxu0
        %v558 = vadd.f32 0.0, %v557
        %v559 = vpop.f32.mrb[0].mxu0
        %560 = vmatprep.mubr.f32.mxu0 0.0
        %561 = vmatmul.mubr.f32.gmra.mrb[0].mxu0 %v435
        %v562 = vpop.f32.mrb[0].mxu0
        %v563 = vadd.f32 0.0, %v562
        %v564 = vpop.f32.mrb[0].mxu0
        %565 = vmatprep.mubr.f32.mxu0 0.0
        %566 = vmatmul.mubr.f32.gmra.mrb[0].mxu0 %v438
        %v567 = vpop.f32.mrb[0].mxu0
        %v568 = vadd.f32 0.0, %v567
        %v569 = vpop.f32.mrb[0].mxu0
        %570 = vmatprep.mubr.f32.mxu0 0.0
        %571 = vmatmul.mubr.f32.gmra.mrb[0].mxu0 %v441
        %v572 = vpop.f32.mrb[0].mxu0
        %v573 = vadd.f32 0.0, %v572
        %v574 = vpop.f32.mrb[0].mxu0
        %575 = vmatprep.mubr.f32.mxu0 0.0
        %576 = vmatmul.mubr.f32.gmra.mrb[0].mxu0 %v444
        %v577 = vpop.f32.mrb[0].mxu0
        %v578 = vadd.f32 0.0, %v577
        %v579 = vpop.f32.mrb[0].mxu0
        %580 = vmatprep.mubr.f32.mxu0 0.0
        %581 = vmatmul.mubr.f32.gmra.mrb[0].mxu0 %v447
        %v582 = vpop.f32.mrb[0].mxu0
        %v583 = vadd.f32 0.0, %v582
        %v584 = vpop.f32.mrb[0].mxu0
        %585 = vmatprep.mubr.f32.mxu0 0.0
        %586 = vmatmul.mubr.f32.gmra.mrb[0].mxu0 %v450
        %v587 = vpop.f32.mrb[0].mxu0
        %v588 = vadd.f32 0.0, %v587
        %v589 = vpop.f32.mrb[0].mxu0
        %590 = vmatprep.mubr.f32.mxu0 0.0
        %591 = vmatmul.mubr.f32.gmra.mrb[0].mxu0 %v453
        %v592 = vpop.f32.mrb[0].mxu0
        %v593 = vadd.f32 0.0, %v592
        %v594 = vpop.f32.mrb[0].mxu0
        %595 = vmatprep.mubr.f32.mxu0 0.0
        %596 = vmatmul.mubr.f32.gmra.mrb[0].mxu0 %v456
        %v597 = vpop.f32.mrb[0].mxu0
        %v598 = vadd.f32 0.0, %v597
        %v599 = vpop.f32.mrb[0].mxu0
        %600 = vmatprep.mubr.f32.mxu0 0.0
        %601 = vmatmul.mubr.f32.gmra.mrb[0].mxu0 %v459
        %v602 = vpop.f32.mrb[0].mxu0
        %v603 = vadd.f32 0.0, %v602
        %v604 = vpop.f32.mrb[0].mxu0
        %605 = vmatprep.mubr.f32.mxu0 0.0
        %606 = vmatmul.mubr.f32.gmra.mrb[0].mxu0 %v462
        %v607 = vpop.f32.mrb[0].mxu0
        %v608 = vadd.f32 0.0, %v607
        %v609 = vpop.f32.mrb[0].mxu0
        %610 = vmatprep.mubr.f32.mxu0 0.0
        %611 = vmatmul.mubr.f32.gmra.mrb[0].mxu0 %v465
        %v612 = vpop.f32.mrb[0].mxu0
        %v613 = vadd.f32 0.0, %v612
        %v614 = vpop.f32.mrb[0].mxu0
        %615 = vdwg.mxu0
        %v617 = vsel %vm418, %v383, 0
        %v620 = vsel %vm418, %v384, 0
        %v623 = vsel %vm418, %v385, 0
        %v626 = vsel %vm418, %v386, 0
        %v629 = vsel %vm418, %v387, 0
        %v632 = vsel %vm418, %v388, 0
        %v635 = vsel %vm418, %v389, 0
        %v638 = vsel %vm418, %v390, 0
        %v641 = vsel %vm418, %v391, 0
        %v644 = vsel %vm418, %v392, 0
        %v647 = vsel %vm418, %v393, 0
        %v650 = vsel %vm418, %v394, 0
        %v653 = vsel %vm418, %v395, 0
        %v656 = vsel %vm418, %v396, 0
        %v659 = vsel %vm418, %v397, 0
        %v662 = vsel %vm418, %v398, 0
        %v665 = vsel %vm467, %v399, 0
        %667 = vmatprep.subr.mxu0 0.0
        %668 = vmatpush1.msra.mxu0 %v665
        %669 = vmatprep.subr.mxu0 0.0
        %670 = vmatpush1.msra.mxu0 0.0
        %671 = vmatprep.subr.mxu0 0.0
        %672 = vmatpush1.msra.mxu0 0.0
        %673 = vmatprep.subr.mxu0 0.0
        %674 = vmatpush1.msra.mxu0 0.0
        %675 = vmatprep.subr.mxu0 0.0
        %676 = vmatpush1.msra.mxu0 0.0
        %677 = vmatprep.subr.mxu0 0.0
        %678 = vmatpush1.msra.mxu0 0.0
        %679 = vmatprep.subr.mxu0 0.0
        %680 = vmatpush1.msra.mxu0 0.0
        %681 = vmatprep.subr.mxu0 0.0
        %682 = vmatpush1.msra.mxu0 0.0
        %683 = vmatprep.subr.mxu0 0.0
        %684 = vmatpush1.msra.mxu0 0.0
        %685 = vmatprep.subr.mxu0 0.0
        %686 = vmatpush1.msra.mxu0 0.0
        %687 = vmatprep.subr.mxu0 0.0
        %688 = vmatpush1.msra.mxu0 0.0
        %689 = vmatprep.subr.mxu0 0.0
        %690 = vmatpush1.msra.mxu0 0.0
        %691 = vmatprep.subr.mxu0 0.0
        %692 = vmatpush1.msra.mxu0 0.0
        %693 = vmatprep.subr.mxu0 0.0
        %694 = vmatpush1.msra.mxu0 0.0
        %695 = vmatprep.subr.mxu0 0.0
        %696 = vmatpush1.msra.mxu0 0.0
        %697 = vmatprep.subr.mxu0 0.0
        %698 = vmatpush1.msra.mxu0 0.0
        %699 = vmatprep.subr.mxu0 0.0
        %700 = vmatpush1.msra.mxu0 0.0
        %701 = vmatprep.subr.mxu0 0.0
        %702 = vmatpush1.msra.mxu0 0.0
        %703 = vmatprep.subr.mxu0 0.0
        %704 = vmatpush1.msra.mxu0 0.0
        %705 = vmatprep.subr.mxu0 0.0
        %706 = vmatpush1.msra.mxu0 0.0
        %707 = vmatprep.subr.mxu0 0.0
        %708 = vmatpush1.msra.mxu0 0.0
        %709 = vmatprep.subr.mxu0 0.0
        %710 = vmatpush1.msra.mxu0 0.0
        %711 = vmatprep.subr.mxu0 0.0
        %712 = vmatpush1.msra.mxu0 0.0
        %713 = vmatprep.subr.mxu0 0.0
        %714 = vmatpush1.msra.mxu0 0.0
        %715 = vmatprep.subr.mxu0 0.0
        %716 = vmatpush1.msra.mxu0 0.0
        %717 = vmatprep.subr.mxu0 0.0
        %718 = vmatpush1.msra.mxu0 0.0
        %719 = vmatprep.subr.mxu0 0.0
        %720 = vmatpush1.msra.mxu0 0.0
        %721 = vmatprep.subr.mxu0 0.0
        %722 = vmatpush1.msra.mxu0 0.0
        %723 = vmatprep.subr.mxu0 0.0
        %724 = vmatpush1.msra.mxu0 0.0
        %725 = vmatprep.subr.mxu0 0.0
        %726 = vmatpush1.msra.mxu0 0.0
        %727 = vmatprep.subr.mxu0 0.0
        %728 = vmatpush1.msra.mxu0 0.0
        %729 = vmatprep.subr.mxu0 0.0
        %730 = vmatpush1.msra.mxu0 0.0
        %731 = vmatprep.mubr.f32.mxu0 0.0
        %732 = vmatmul.mubr.f32.gmra.mrb[0].mxu0 %v617
        %v733 = vpop.f32.mrb[0].mxu0
        %v734 = vadd.f32 %v538, %v733
        %v735 = vpop.f32.mrb[0].mxu0
        %736 = vmatprep.mubr.f32.mxu0 0.0
        %737 = vmatmul.mubr.f32.gmra.mrb[0].mxu0 %v620
        %v738 = vpop.f32.mrb[0].mxu0
        %v739 = vadd.f32 %v543, %v738
        %v740 = vpop.f32.mrb[0].mxu0
        %741 = vmatprep.mubr.f32.mxu0 0.0
        %742 = vmatmul.mubr.f32.gmra.mrb[0].mxu0 %v623
        %v743 = vpop.f32.mrb[0].mxu0
        %v744 = vadd.f32 %v548, %v743
        %v745 = vpop.f32.mrb[0].mxu0
        %746 = vmatprep.mubr.f32.mxu0 0.0
        %747 = vmatmul.mubr.f32.gmra.mrb[0].mxu0 %v626
        %v748 = vpop.f32.mrb[0].mxu0
        %v749 = vadd.f32 %v553, %v748
        %v750 = vpop.f32.mrb[0].mxu0
        %751 = vmatprep.mubr.f32.mxu0 0.0
        %752 = vmatmul.mubr.f32.gmra.mrb[0].mxu0 %v629
        %v753 = vpop.f32.mrb[0].mxu0
        %v754 = vadd.f32 %v558, %v753
        %v755 = vpop.f32.mrb[0].mxu0
        %756 = vmatprep.mubr.f32.mxu0 0.0
        %757 = vmatmul.mubr.f32.gmra.mrb[0].mxu0 %v632
        %v758 = vpop.f32.mrb[0].mxu0
        %v759 = vadd.f32 %v563, %v758
        %v760 = vpop.f32.mrb[0].mxu0
        %761 = vmatprep.mubr.f32.mxu0 0.0
        %762 = vmatmul.mubr.f32.gmra.mrb[0].mxu0 %v635
        %v763 = vpop.f32.mrb[0].mxu0
        %v764 = vadd.f32 %v568, %v763
        %v765 = vpop.f32.mrb[0].mxu0
        %766 = vmatprep.mubr.f32.mxu0 0.0
        %767 = vmatmul.mubr.f32.gmra.mrb[0].mxu0 %v638
        %v768 = vpop.f32.mrb[0].mxu0
        %v769 = vadd.f32 %v573, %v768
        %v770 = vpop.f32.mrb[0].mxu0
        %771 = vmatprep.mubr.f32.mxu0 0.0
        %772 = vmatmul.mubr.f32.gmra.mrb[0].mxu0 %v641
        %v773 = vpop.f32.mrb[0].mxu0
        %v774 = vadd.f32 %v578, %v773
        %v775 = vpop.f32.mrb[0].mxu0
        %776 = vmatprep.mubr.f32.mxu0 0.0
        %777 = vmatmul.mubr.f32.gmra.mrb[0].mxu0 %v644
        %v778 = vpop.f32.mrb[0].mxu0
        %v779 = vadd.f32 %v583, %v778
        %v780 = vpop.f32.mrb[0].mxu0
        %781 = vmatprep.mubr.f32.mxu0 0.0
        %782 = vmatmul.mubr.f32.gmra.mrb[0].mxu0 %v647
        %v783 = vpop.f32.mrb[0].mxu0
        %v784 = vadd.f32 %v588, %v783
        %v785 = vpop.f32.mrb[0].mxu0
        %786 = vmatprep.mubr.f32.mxu0 0.0
        %787 = vmatmul.mubr.f32.gmra.mrb[0].mxu0 %v650
        %v788 = vpop.f32.mrb[0].mxu0
        %v789 = vadd.f32 %v593, %v788
        %v790 = vpop.f32.mrb[0].mxu0
        %791 = vmatprep.mubr.f32.mxu0 0.0
        %792 = vmatmul.mubr.f32.gmra.mrb[0].mxu0 %v653
        %v793 = vpop.f32.mrb[0].mxu0
        %v794 = vadd.f32 %v598, %v793
        %v795 = vpop.f32.mrb[0].mxu0
        %796 = vmatprep.mubr.f32.mxu0 0.0
        %797 = vmatmul.mubr.f32.gmra.mrb[0].mxu0 %v656
        %v798 = vpop.f32.mrb[0].mxu0
        %v799 = vadd.f32 %v603, %v798
        %v800 = vpop.f32.mrb[0].mxu0
        %801 = vmatprep.mubr.f32.mxu0 0.0
        %802 = vmatmul.mubr.f32.gmra.mrb[0].mxu0 %v659
        %v803 = vpop.f32.mrb[0].mxu0
        %v804 = vadd.f32 %v608, %v803
        %v805 = vpop.f32.mrb[0].mxu0
        %806 = vmatprep.mubr.f32.mxu0 0.0
        %807 = vmatmul.mubr.f32.gmra.mrb[0].mxu0 %v662
        %v808 = vpop.f32.mrb[0].mxu0
        %v809 = vadd.f32 %v613, %v808
        %v810 = vpop.f32.mrb[0].mxu0
        %811 = vdwg.mxu0
        %v812 = vld [vmem:[%s334 + $0x2] sm:$0xff]
        %v813 = vld [vmem:[%s334 + $0xa] sm:$0xff]
        %v814 = vld [vmem:[%s334 + $0x1a] sm:$0xff]
        %v815 = vld [vmem:[%s334 + $0x22] sm:$0xff]
        %v816 = vld [vmem:[%s334 + $0x32] sm:$0xff]
        %v817 = vld [vmem:[%s334 + $0x3a] sm:$0xff]
        %v818 = vld [vmem:[%s334 + $0x4a] sm:$0xff]
        %v819 = vld [vmem:[%s334 + $0x52] sm:$0xff]
        %v820 = vld [vmem:[%s334 + $0x62] sm:$0xff]
        %v821 = vld [vmem:[%s334 + $0x6a] sm:$0xff]
        %v822 = vld [vmem:[%s334 + $0x7a] sm:$0xff]
        %v823 = vld [vmem:[%s334 + $0x82] sm:$0xff]
        %v824 = vld [vmem:[%s334 + $0x92] sm:$0xff]
        %v825 = vld [vmem:[%s334 + $0x9a] sm:$0xff]
        %v826 = vld [vmem:[%s334 + $0xaa] sm:$0xff]
        %v827 = vld [vmem:[%s334 + $0xb2] sm:$0xff]
        %s828 = scalar_lea.vmem [#allocation2], 8
        %v829 = vld [vmem:[%s828] sm:$0xf]
        %v831 = vsel %vm418, %v812, 0
        %v834 = vsel %vm418, %v813, 0
        %v837 = vsel %vm418, %v814, 0
        %v840 = vsel %vm418, %v815, 0
        %v843 = vsel %vm418, %v816, 0
        %v846 = vsel %vm418, %v817, 0
        %v849 = vsel %vm418, %v818, 0
        %v852 = vsel %vm418, %v819, 0
        %v855 = vsel %vm418, %v820, 0
        %v858 = vsel %vm418, %v821, 0
        %v861 = vsel %vm418, %v822, 0
        %v864 = vsel %vm418, %v823, 0
        %v867 = vsel %vm418, %v824, 0
        %v870 = vsel %vm418, %v825, 0
        %v873 = vsel %vm418, %v826, 0
        %v876 = vsel %vm418, %v827, 0
        %v879 = vsel %vm467, %v829, 0
        %881 = vmatprep.subr.mxu0 0.0
        %882 = vmatpush1.msra.mxu0 %v879
        %883 = vmatprep.subr.mxu0 0.0
        %884 = vmatpush1.msra.mxu0 0.0
        %885 = vmatprep.subr.mxu0 0.0
        %886 = vmatpush1.msra.mxu0 0.0
        %887 = vmatprep.subr.mxu0 0.0
        %888 = vmatpush1.msra.mxu0 0.0
        %889 = vmatprep.subr.mxu0 0.0
        %890 = vmatpush1.msra.mxu0 0.0
        %891 = vmatprep.subr.mxu0 0.0
        %892 = vmatpush1.msra.mxu0 0.0
        %893 = vmatprep.subr.mxu0 0.0
        %894 = vmatpush1.msra.mxu0 0.0
        %895 = vmatprep.subr.mxu0 0.0
        %896 = vmatpush1.msra.mxu0 0.0
        %897 = vmatprep.subr.mxu0 0.0
        %898 = vmatpush1.msra.mxu0 0.0
        %899 = vmatprep.subr.mxu0 0.0
        %900 = vmatpush1.msra.mxu0 0.0
        %901 = vmatprep.subr.mxu0 0.0
        %902 = vmatpush1.msra.mxu0 0.0
        %903 = vmatprep.subr.mxu0 0.0
        %904 = vmatpush1.msra.mxu0 0.0
        %905 = vmatprep.subr.mxu0 0.0
        %906 = vmatpush1.msra.mxu0 0.0
        %907 = vmatprep.subr.mxu0 0.0
        %908 = vmatpush1.msra.mxu0 0.0
        %909 = vmatprep.subr.mxu0 0.0
        %910 = vmatpush1.msra.mxu0 0.0
        %911 = vmatprep.subr.mxu0 0.0
        %912 = vmatpush1.msra.mxu0 0.0
        %913 = vmatprep.subr.mxu0 0.0
        %914 = vmatpush1.msra.mxu0 0.0
        %915 = vmatprep.subr.mxu0 0.0
        %916 = vmatpush1.msra.mxu0 0.0
        %917 = vmatprep.subr.mxu0 0.0
        %918 = vmatpush1.msra.mxu0 0.0
        %919 = vmatprep.subr.mxu0 0.0
        %920 = vmatpush1.msra.mxu0 0.0
        %921 = vmatprep.subr.mxu0 0.0
        %922 = vmatpush1.msra.mxu0 0.0
        %923 = vmatprep.subr.mxu0 0.0
        %924 = vmatpush1.msra.mxu0 0.0
        %925 = vmatprep.subr.mxu0 0.0
        %926 = vmatpush1.msra.mxu0 0.0
        %927 = vmatprep.subr.mxu0 0.0
        %928 = vmatpush1.msra.mxu0 0.0
        %929 = vmatprep.subr.mxu0 0.0
        %930 = vmatpush1.msra.mxu0 0.0
        %931 = vmatprep.subr.mxu0 0.0
        %932 = vmatpush1.msra.mxu0 0.0
        %933 = vmatprep.subr.mxu0 0.0
        %934 = vmatpush1.msra.mxu0 0.0
        %935 = vmatprep.subr.mxu0 0.0
        %936 = vmatpush1.msra.mxu0 0.0
        %937 = vmatprep.subr.mxu0 0.0
        %938 = vmatpush1.msra.mxu0 0.0
        %939 = vmatprep.subr.mxu0 0.0
        %940 = vmatpush1.msra.mxu0 0.0
        %941 = vmatprep.subr.mxu0 0.0
        %942 = vmatpush1.msra.mxu0 0.0
        %943 = vmatprep.subr.mxu0 0.0
        %944 = vmatpush1.msra.mxu0 0.0
        %945 = vmatprep.mubr.f32.mxu0 0.0
        %946 = vmatmul.mubr.f32.gmra.mrb[0].mxu0 %v831
        %v947 = vpop.f32.mrb[0].mxu0
        %v948 = vadd.f32 0.0, %v947
        %v949 = vpop.f32.mrb[0].mxu0
        %950 = vmatprep.mubr.f32.mxu0 0.0
        %951 = vmatmul.mubr.f32.gmra.mrb[0].mxu0 %v834
        %v952 = vpop.f32.mrb[0].mxu0
        %v953 = vadd.f32 0.0, %v952
        %v954 = vpop.f32.mrb[0].mxu0
        %955 = vmatprep.mubr.f32.mxu0 0.0
        %956 = vmatmul.mubr.f32.gmra.mrb[0].mxu0 %v837
        %v957 = vpop.f32.mrb[0].mxu0
        %v958 = vadd.f32 0.0, %v957
        %v959 = vpop.f32.mrb[0].mxu0
        %960 = vmatprep.mubr.f32.mxu0 0.0
        %961 = vmatmul.mubr.f32.gmra.mrb[0].mxu0 %v840
        %v962 = vpop.f32.mrb[0].mxu0
        %v963 = vadd.f32 0.0, %v962
        %v964 = vpop.f32.mrb[0].mxu0
        %965 = vmatprep.mubr.f32.mxu0 0.0
        %966 = vmatmul.mubr.f32.gmra.mrb[0].mxu0 %v843
        %v967 = vpop.f32.mrb[0].mxu0
        %v968 = vadd.f32 0.0, %v967
        %v969 = vpop.f32.mrb[0].mxu0
        %970 = vmatprep.mubr.f32.mxu0 0.0
        %971 = vmatmul.mubr.f32.gmra.mrb[0].mxu0 %v846
        %v972 = vpop.f32.mrb[0].mxu0
        %v973 = vadd.f32 0.0, %v972
        %v974 = vpop.f32.mrb[0].mxu0
        %975 = vmatprep.mubr.f32.mxu0 0.0
        %976 = vmatmul.mubr.f32.gmra.mrb[0].mxu0 %v849
        %v977 = vpop.f32.mrb[0].mxu0
        %v978 = vadd.f32 0.0, %v977
        %v979 = vpop.f32.mrb[0].mxu0
        %980 = vmatprep.mubr.f32.mxu0 0.0
        %981 = vmatmul.mubr.f32.gmra.mrb[0].mxu0 %v852
        %v982 = vpop.f32.mrb[0].mxu0
        %v983 = vadd.f32 0.0, %v982
        %v984 = vpop.f32.mrb[0].mxu0
        %985 = vmatprep.mubr.f32.mxu0 0.0
        %986 = vmatmul.mubr.f32.gmra.mrb[0].mxu0 %v855
        %v987 = vpop.f32.mrb[0].mxu0
        %v988 = vadd.f32 0.0, %v987
        %v989 = vpop.f32.mrb[0].mxu0
        %990 = vmatprep.mubr.f32.mxu0 0.0
        %991 = vmatmul.mubr.f32.gmra.mrb[0].mxu0 %v858
        %v992 = vpop.f32.mrb[0].mxu0
        %v993 = vadd.f32 0.0, %v992
        %v994 = vpop.f32.mrb[0].mxu0
        %995 = vmatprep.mubr.f32.mxu0 0.0
        %996 = vmatmul.mubr.f32.gmra.mrb[0].mxu0 %v861
        %v997 = vpop.f32.mrb[0].mxu0
        %v998 = vadd.f32 0.0, %v997
        %v999 = vpop.f32.mrb[0].mxu0
        %1000 = vmatprep.mubr.f32.mxu0 0.0
        %1001 = vmatmul.mubr.f32.gmra.mrb[0].mxu0 %v864
        %v1002 = vpop.f32.mrb[0].mxu0
        %v1003 = vadd.f32 0.0, %v1002
        %v1004 = vpop.f32.mrb[0].mxu0
        %1005 = vmatprep.mubr.f32.mxu0 0.0
        %1006 = vmatmul.mubr.f32.gmra.mrb[0].mxu0 %v867
        %v1007 = vpop.f32.mrb[0].mxu0
        %v1008 = vadd.f32 0.0, %v1007
        %v1009 = vpop.f32.mrb[0].mxu0
        %1010 = vmatprep.mubr.f32.mxu0 0.0
        %1011 = vmatmul.mubr.f32.gmra.mrb[0].mxu0 %v870
        %v1012 = vpop.f32.mrb[0].mxu0
        %v1013 = vadd.f32 0.0, %v1012
        %v1014 = vpop.f32.mrb[0].mxu0
        %1015 = vmatprep.mubr.f32.mxu0 0.0
        %1016 = vmatmul.mubr.f32.gmra.mrb[0].mxu0 %v873
        %v1017 = vpop.f32.mrb[0].mxu0
        %v1018 = vadd.f32 0.0, %v1017
        %v1019 = vpop.f32.mrb[0].mxu0
        %1020 = vmatprep.mubr.f32.mxu0 0.0
        %1021 = vmatmul.mubr.f32.gmra.mrb[0].mxu0 %v876
        %v1022 = vpop.f32.mrb[0].mxu0
        %v1023 = vadd.f32 0.0, %v1022
        %v1024 = vpop.f32.mrb[0].mxu0
        %1025 = vdwg.mxu0
        %v1026 = vadd.f32 %v734, %v948
        %v1027 = vadd.f32 %v739, %v953
        %v1028 = vadd.f32 %v744, %v958
        %v1029 = vadd.f32 %v749, %v963
        %v1030 = vadd.f32 %v754, %v968
        %v1031 = vadd.f32 %v759, %v973
        %v1032 = vadd.f32 %v764, %v978
        %v1033 = vadd.f32 %v769, %v983
        %v1034 = vadd.f32 %v774, %v988
        %v1035 = vadd.f32 %v779, %v993
        %v1036 = vadd.f32 %v784, %v998
        %v1037 = vadd.f32 %v789, %v1003
        %v1038 = vadd.f32 %v794, %v1008
        %v1039 = vadd.f32 %v799, %v1013
        %v1040 = vadd.f32 %v804, %v1018
        %v1041 = vadd.f32 %v809, %v1023
        %s1042 = scalar_lea.vmem %s334, 24
        %v1043 = vld [vmem:[%s1042] sm:$0xff]
        %v1044 = vld [vmem:[%s1042 + $0x8] sm:$0xff]
        %v1045 = vld [vmem:[%s1042 + $0x18] sm:$0xff]
        %v1046 = vld [vmem:[%s1042 + $0x20] sm:$0xff]
        %v1047 = vld [vmem:[%s1042 + $0x30] sm:$0xff]
        %v1048 = vld [vmem:[%s1042 + $0x38] sm:$0xff]
        %v1049 = vld [vmem:[%s1042 + $0x48] sm:$0xff]
        %v1050 = vld [vmem:[%s1042 + $0x50] sm:$0xff]
        %v1051 = vld [vmem:[%s1042 + $0x60] sm:$0xff]
        %v1052 = vld [vmem:[%s1042 + $0x68] sm:$0xff]
        %v1053 = vld [vmem:[%s1042 + $0x78] sm:$0xff]
        %v1054 = vld [vmem:[%s1042 + $0x80] sm:$0xff]
        %v1055 = vld [vmem:[%s1042 + $0x90] sm:$0xff]
        %v1056 = vld [vmem:[%s1042 + $0x98] sm:$0xff]
        %v1057 = vld [vmem:[%s1042 + $0xa8] sm:$0xff]
        %v1058 = vld [vmem:[%s1042 + $0xb0] sm:$0xff]
        %s1059 = scalar_lea.vmem [#allocation2], 12
        %v1060 = vld [vmem:[%s1059] sm:$0xf]
        %v1062 = vsel %vm418, %v1043, 0
        %v1065 = vsel %vm418, %v1044, 0
        %v1068 = vsel %vm418, %v1045, 0
        %v1071 = vsel %vm418, %v1046, 0
        %v1074 = vsel %vm418, %v1047, 0
        %v1077 = vsel %vm418, %v1048, 0
        %v1080 = vsel %vm418, %v1049, 0
        %v1083 = vsel %vm418, %v1050, 0
        %v1086 = vsel %vm418, %v1051, 0
        %v1089 = vsel %vm418, %v1052, 0
        %v1092 = vsel %vm418, %v1053, 0
        %v1095 = vsel %vm418, %v1054, 0
        %v1098 = vsel %vm418, %v1055, 0
        %v1101 = vsel %vm418, %v1056, 0
        %v1104 = vsel %vm418, %v1057, 0
        %v1107 = vsel %vm418, %v1058, 0
        %v1110 = vsel %vm467, %v1060, 0
        %1112 = vmatprep.subr.mxu0 0.0
        %1113 = vmatpush1.msra.mxu0 %v1110
        %1114 = vmatprep.subr.mxu0 0.0
        %1115 = vmatpush1.msra.mxu0 0.0
        %1116 = vmatprep.subr.mxu0 0.0
        %1117 = vmatpush1.msra.mxu0 0.0
        %1118 = vmatprep.subr.mxu0 0.0
        %1119 = vmatpush1.msra.mxu0 0.0
        %1120 = vmatprep.subr.mxu0 0.0
        %1121 = vmatpush1.msra.mxu0 0.0
        %1122 = vmatprep.subr.mxu0 0.0
        %1123 = vmatpush1.msra.mxu0 0.0
        %1124 = vmatprep.subr.mxu0 0.0
        %1125 = vmatpush1.msra.mxu0 0.0
        %1126 = vmatprep.subr.mxu0 0.0
        %1127 = vmatpush1.msra.mxu0 0.0
        %1128 = vmatprep.subr.mxu0 0.0
        %1129 = vmatpush1.msra.mxu0 0.0
        %1130 = vmatprep.subr.mxu0 0.0
        %1131 = vmatpush1.msra.mxu0 0.0
        %1132 = vmatprep.subr.mxu0 0.0
        %1133 = vmatpush1.msra.mxu0 0.0
        %1134 = vmatprep.subr.mxu0 0.0
        %1135 = vmatpush1.msra.mxu0 0.0
        %1136 = vmatprep.subr.mxu0 0.0
        %1137 = vmatpush1.msra.mxu0 0.0
        %1138 = vmatprep.subr.mxu0 0.0
        %1139 = vmatpush1.msra.mxu0 0.0
        %1140 = vmatprep.subr.mxu0 0.0
        %1141 = vmatpush1.msra.mxu0 0.0
        %1142 = vmatprep.subr.mxu0 0.0
        %1143 = vmatpush1.msra.mxu0 0.0
        %1144 = vmatprep.subr.mxu0 0.0
        %1145 = vmatpush1.msra.mxu0 0.0
        %1146 = vmatprep.subr.mxu0 0.0
        %1147 = vmatpush1.msra.mxu0 0.0
        %1148 = vmatprep.subr.mxu0 0.0
        %1149 = vmatpush1.msra.mxu0 0.0
        %1150 = vmatprep.subr.mxu0 0.0
        %1151 = vmatpush1.msra.mxu0 0.0
        %1152 = vmatprep.subr.mxu0 0.0
        %1153 = vmatpush1.msra.mxu0 0.0
        %1154 = vmatprep.subr.mxu0 0.0
        %1155 = vmatpush1.msra.mxu0 0.0
        %1156 = vmatprep.subr.mxu0 0.0
        %1157 = vmatpush1.msra.mxu0 0.0
        %1158 = vmatprep.subr.mxu0 0.0
        %1159 = vmatpush1.msra.mxu0 0.0
        %1160 = vmatprep.subr.mxu0 0.0
        %1161 = vmatpush1.msra.mxu0 0.0
        %1162 = vmatprep.subr.mxu0 0.0
        %1163 = vmatpush1.msra.mxu0 0.0
        %1164 = vmatprep.subr.mxu0 0.0
        %1165 = vmatpush1.msra.mxu0 0.0
        %1166 = vmatprep.subr.mxu0 0.0
        %1167 = vmatpush1.msra.mxu0 0.0
        %1168 = vmatprep.subr.mxu0 0.0
        %1169 = vmatpush1.msra.mxu0 0.0
        %1170 = vmatprep.subr.mxu0 0.0
        %1171 = vmatpush1.msra.mxu0 0.0
        %1172 = vmatprep.subr.mxu0 0.0
        %1173 = vmatpush1.msra.mxu0 0.0
        %1174 = vmatprep.subr.mxu0 0.0
        %1175 = vmatpush1.msra.mxu0 0.0
        %1176 = vmatprep.mubr.f32.mxu0 0.0
        %1177 = vmatmul.mubr.f32.gmra.mrb[0].mxu0 %v1062
        %v1178 = vpop.f32.mrb[0].mxu0
        %v1179 = vadd.f32 0.0, %v1178
        %v1180 = vpop.f32.mrb[0].mxu0
        %1181 = vmatprep.mubr.f32.mxu0 0.0
        %1182 = vmatmul.mubr.f32.gmra.mrb[0].mxu0 %v1065
        %v1183 = vpop.f32.mrb[0].mxu0
        %v1184 = vadd.f32 0.0, %v1183
        %v1185 = vpop.f32.mrb[0].mxu0
        %1186 = vmatprep.mubr.f32.mxu0 0.0
        %1187 = vmatmul.mubr.f32.gmra.mrb[0].mxu0 %v1068
        %v1188 = vpop.f32.mrb[0].mxu0
        %v1189 = vadd.f32 0.0, %v1188
        %v1190 = vpop.f32.mrb[0].mxu0
        %1191 = vmatprep.mubr.f32.mxu0 0.0
        %1192 = vmatmul.mubr.f32.gmra.mrb[0].mxu0 %v1071
        %v1193 = vpop.f32.mrb[0].mxu0
        %v1194 = vadd.f32 0.0, %v1193
        %v1195 = vpop.f32.mrb[0].mxu0
        %1196 = vmatprep.mubr.f32.mxu0 0.0
        %1197 = vmatmul.mubr.f32.gmra.mrb[0].mxu0 %v1074
        %v1198 = vpop.f32.mrb[0].mxu0
        %v1199 = vadd.f32 0.0, %v1198
        %v1200 = vpop.f32.mrb[0].mxu0
        %1201 = vmatprep.mubr.f32.mxu0 0.0
        %1202 = vmatmul.mubr.f32.gmra.mrb[0].mxu0 %v1077
        %v1203 = vpop.f32.mrb[0].mxu0
        %v1204 = vadd.f32 0.0, %v1203
        %v1205 = vpop.f32.mrb[0].mxu0
        %1206 = vmatprep.mubr.f32.mxu0 0.0
        %1207 = vmatmul.mubr.f32.gmra.mrb[0].mxu0 %v1080
        %v1208 = vpop.f32.mrb[0].mxu0
        %v1209 = vadd.f32 0.0, %v1208
        %v1210 = vpop.f32.mrb[0].mxu0
        %1211 = vmatprep.mubr.f32.mxu0 0.0
        %1212 = vmatmul.mubr.f32.gmra.mrb[0].mxu0 %v1083
        %v1213 = vpop.f32.mrb[0].mxu0
        %v1214 = vadd.f32 0.0, %v1213
        %v1215 = vpop.f32.mrb[0].mxu0
        %1216 = vmatprep.mubr.f32.mxu0 0.0
        %1217 = vmatmul.mubr.f32.gmra.mrb[0].mxu0 %v1086
        %v1218 = vpop.f32.mrb[0].mxu0
        %v1219 = vadd.f32 0.0, %v1218
        %v1220 = vpop.f32.mrb[0].mxu0
        %1221 = vmatprep.mubr.f32.mxu0 0.0
        %1222 = vmatmul.mubr.f32.gmra.mrb[0].mxu0 %v1089
        %v1223 = vpop.f32.mrb[0].mxu0
        %v1224 = vadd.f32 0.0, %v1223
        %v1225 = vpop.f32.mrb[0].mxu0
        %1226 = vmatprep.mubr.f32.mxu0 0.0
        %1227 = vmatmul.mubr.f32.gmra.mrb[0].mxu0 %v1092
        %v1228 = vpop.f32.mrb[0].mxu0
        %v1229 = vadd.f32 0.0, %v1228
        %v1230 = vpop.f32.mrb[0].mxu0
        %1231 = vmatprep.mubr.f32.mxu0 0.0
        %1232 = vmatmul.mubr.f32.gmra.mrb[0].mxu0 %v1095
        %v1233 = vpop.f32.mrb[0].mxu0
        %v1234 = vadd.f32 0.0, %v1233
        %v1235 = vpop.f32.mrb[0].mxu0
        %1236 = vmatprep.mubr.f32.mxu0 0.0
        %1237 = vmatmul.mubr.f32.gmra.mrb[0].mxu0 %v1098
        %v1238 = vpop.f32.mrb[0].mxu0
        %v1239 = vadd.f32 0.0, %v1238
        %v1240 = vpop.f32.mrb[0].mxu0
        %1241 = vmatprep.mubr.f32.mxu0 0.0
        %1242 = vmatmul.mubr.f32.gmra.mrb[0].mxu0 %v1101
        %v1243 = vpop.f32.mrb[0].mxu0
        %v1244 = vadd.f32 0.0, %v1243
        %v1245 = vpop.f32.mrb[0].mxu0
        %1246 = vmatprep.mubr.f32.mxu0 0.0
        %1247 = vmatmul.mubr.f32.gmra.mrb[0].mxu0 %v1104
        %v1248 = vpop.f32.mrb[0].mxu0
        %v1249 = vadd.f32 0.0, %v1248
        %v1250 = vpop.f32.mrb[0].mxu0
        %1251 = vmatprep.mubr.f32.mxu0 0.0
        %1252 = vmatmul.mubr.f32.gmra.mrb[0].mxu0 %v1107
        %v1253 = vpop.f32.mrb[0].mxu0
        %v1254 = vadd.f32 0.0, %v1253
        %v1255 = vpop.f32.mrb[0].mxu0
        %1256 = vdwg.mxu0
        %v1257 = vadd.f32 %v1026, %v1179
        %v1258 = vadd.f32 %v1027, %v1184
        %v1259 = vadd.f32 %v1028, %v1189
        %v1260 = vadd.f32 %v1029, %v1194
        %v1261 = vadd.f32 %v1030, %v1199
        %v1262 = vadd.f32 %v1031, %v1204
        %v1263 = vadd.f32 %v1032, %v1209
        %v1264 = vadd.f32 %v1033, %v1214
        %v1265 = vadd.f32 %v1034, %v1219
        %v1266 = vadd.f32 %v1035, %v1224
        %v1267 = vadd.f32 %v1036, %v1229
        %v1268 = vadd.f32 %v1037, %v1234
        %v1269 = vadd.f32 %v1038, %v1239
        %v1270 = vadd.f32 %v1039, %v1244
        %v1271 = vadd.f32 %v1040, %v1249
        %v1272 = vadd.f32 %v1041, %v1254
        %v1273 = vld [vmem:[%s1042 + $0x1] sm:$0xff]
        %v1274 = vld [vmem:[%s1042 + $0x9] sm:$0xff]
        %v1275 = vld [vmem:[%s1042 + $0x19] sm:$0xff]
        %v1276 = vld [vmem:[%s1042 + $0x21] sm:$0xff]
        %v1277 = vld [vmem:[%s1042 + $0x31] sm:$0xff]
        %v1278 = vld [vmem:[%s1042 + $0x39] sm:$0xff]
        %v1279 = vld [vmem:[%s1042 + $0x49] sm:$0xff]
        %v1280 = vld [vmem:[%s1042 + $0x51] sm:$0xff]
        %v1281 = vld [vmem:[%s1042 + $0x61] sm:$0xff]
        %v1282 = vld [vmem:[%s1042 + $0x69] sm:$0xff]
        %v1283 = vld [vmem:[%s1042 + $0x79] sm:$0xff]
        %v1284 = vld [vmem:[%s1042 + $0x81] sm:$0xff]
        %v1285 = vld [vmem:[%s1042 + $0x91] sm:$0xff]
        %v1286 = vld [vmem:[%s1042 + $0x99] sm:$0xff]
        %v1287 = vld [vmem:[%s1042 + $0xa9] sm:$0xff]
        %v1288 = vld [vmem:[%s1042 + $0xb1] sm:$0xff]
        %s1289 = scalar_lea.vmem [#allocation2], 16
        %v1290 = vld [vmem:[%s1289] sm:$0xf]
        %v1292 = vsel %vm418, %v1273, 0
        %v1295 = vsel %vm418, %v1274, 0
        %v1298 = vsel %vm418, %v1275, 0
        %v1301 = vsel %vm418, %v1276, 0
        %v1304 = vsel %vm418, %v1277, 0
        %v1307 = vsel %vm418, %v1278, 0
        %v1310 = vsel %vm418, %v1279, 0
        %v1313 = vsel %vm418, %v1280, 0
        %v1316 = vsel %vm418, %v1281, 0
        %v1319 = vsel %vm418, %v1282, 0
        %v1322 = vsel %vm418, %v1283, 0
        %v1325 = vsel %vm418, %v1284, 0
        %v1328 = vsel %vm418, %v1285, 0
        %v1331 = vsel %vm418, %v1286, 0
        %v1334 = vsel %vm418, %v1287, 0
        %v1337 = vsel %vm418, %v1288, 0
        %v1340 = vsel %vm467, %v1290, 0
        %1342 = vmatprep.subr.mxu0 0.0
        %1343 = vmatpush1.msra.mxu0 %v1340
        %1344 = vmatprep.subr.mxu0 0.0
        %1345 = vmatpush1.msra.mxu0 0.0
        %1346 = vmatprep.subr.mxu0 0.0
        %1347 = vmatpush1.msra.mxu0 0.0
        %1348 = vmatprep.subr.mxu0 0.0
        %1349 = vmatpush1.msra.mxu0 0.0
        %1350 = vmatprep.subr.mxu0 0.0
        %1351 = vmatpush1.msra.mxu0 0.0
        %1352 = vmatprep.subr.mxu0 0.0
        %1353 = vmatpush1.msra.mxu0 0.0
        %1354 = vmatprep.subr.mxu0 0.0
        %1355 = vmatpush1.msra.mxu0 0.0
        %1356 = vmatprep.subr.mxu0 0.0
        %1357 = vmatpush1.msra.mxu0 0.0
        %1358 = vmatprep.subr.mxu0 0.0
        %1359 = vmatpush1.msra.mxu0 0.0
        %1360 = vmatprep.subr.mxu0 0.0
        %1361 = vmatpush1.msra.mxu0 0.0
        %1362 = vmatprep.subr.mxu0 0.0
        %1363 = vmatpush1.msra.mxu0 0.0
        %1364 = vmatprep.subr.mxu0 0.0
        %1365 = vmatpush1.msra.mxu0 0.0
        %1366 = vmatprep.subr.mxu0 0.0
        %1367 = vmatpush1.msra.mxu0 0.0
        %1368 = vmatprep.subr.mxu0 0.0
        %1369 = vmatpush1.msra.mxu0 0.0
        %1370 = vmatprep.subr.mxu0 0.0
        %1371 = vmatpush1.msra.mxu0 0.0
        %1372 = vmatprep.subr.mxu0 0.0
        %1373 = vmatpush1.msra.mxu0 0.0
        %1374 = vmatprep.subr.mxu0 0.0
        %1375 = vmatpush1.msra.mxu0 0.0
        %1376 = vmatprep.subr.mxu0 0.0
        %1377 = vmatpush1.msra.mxu0 0.0
        %1378 = vmatprep.subr.mxu0 0.0
        %1379 = vmatpush1.msra.mxu0 0.0
        %1380 = vmatprep.subr.mxu0 0.0
        %1381 = vmatpush1.msra.mxu0 0.0
        %1382 = vmatprep.subr.mxu0 0.0
        %1383 = vmatpush1.msra.mxu0 0.0
        %1384 = vmatprep.subr.mxu0 0.0
        %1385 = vmatpush1.msra.mxu0 0.0
        %1386 = vmatprep.subr.mxu0 0.0
        %1387 = vmatpush1.msra.mxu0 0.0
        %1388 = vmatprep.subr.mxu0 0.0
        %1389 = vmatpush1.msra.mxu0 0.0
        %1390 = vmatprep.subr.mxu0 0.0
        %1391 = vmatpush1.msra.mxu0 0.0
        %1392 = vmatprep.subr.mxu0 0.0
        %1393 = vmatpush1.msra.mxu0 0.0
        %1394 = vmatprep.subr.mxu0 0.0
        %1395 = vmatpush1.msra.mxu0 0.0
        %1396 = vmatprep.subr.mxu0 0.0
        %1397 = vmatpush1.msra.mxu0 0.0
        %1398 = vmatprep.subr.mxu0 0.0
        %1399 = vmatpush1.msra.mxu0 0.0
        %1400 = vmatprep.subr.mxu0 0.0
        %1401 = vmatpush1.msra.mxu0 0.0
        %1402 = vmatprep.subr.mxu0 0.0
        %1403 = vmatpush1.msra.mxu0 0.0
        %1404 = vmatprep.subr.mxu0 0.0
        %1405 = vmatpush1.msra.mxu0 0.0
        %1406 = vmatprep.mubr.f32.mxu0 0.0
        %1407 = vmatmul.mubr.f32.gmra.mrb[0].mxu0 %v1292
        %v1408 = vpop.f32.mrb[0].mxu0
        %v1409 = vadd.f32 0.0, %v1408
        %v1410 = vpop.f32.mrb[0].mxu0
        %1411 = vmatprep.mubr.f32.mxu0 0.0
        %1412 = vmatmul.mubr.f32.gmra.mrb[0].mxu0 %v1295
        %v1413 = vpop.f32.mrb[0].mxu0
        %v1414 = vadd.f32 0.0, %v1413
        %v1415 = vpop.f32.mrb[0].mxu0
        %1416 = vmatprep.mubr.f32.mxu0 0.0
        %1417 = vmatmul.mubr.f32.gmra.mrb[0].mxu0 %v1298
        %v1418 = vpop.f32.mrb[0].mxu0
        %v1419 = vadd.f32 0.0, %v1418
        %v1420 = vpop.f32.mrb[0].mxu0
        %1421 = vmatprep.mubr.f32.mxu0 0.0
        %1422 = vmatmul.mubr.f32.gmra.mrb[0].mxu0 %v1301
        %v1423 = vpop.f32.mrb[0].mxu0
        %v1424 = vadd.f32 0.0, %v1423
        %v1425 = vpop.f32.mrb[0].mxu0
        %1426 = vmatprep.mubr.f32.mxu0 0.0
        %1427 = vmatmul.mubr.f32.gmra.mrb[0].mxu0 %v1304
        %v1428 = vpop.f32.mrb[0].mxu0
        %v1429 = vadd.f32 0.0, %v1428
        %v1430 = vpop.f32.mrb[0].mxu0
        %1431 = vmatprep.mubr.f32.mxu0 0.0
        %1432 = vmatmul.mubr.f32.gmra.mrb[0].mxu0 %v1307
        %v1433 = vpop.f32.mrb[0].mxu0
        %v1434 = vadd.f32 0.0, %v1433
        %v1435 = vpop.f32.mrb[0].mxu0
        %1436 = vmatprep.mubr.f32.mxu0 0.0
        %1437 = vmatmul.mubr.f32.gmra.mrb[0].mxu0 %v1310
        %v1438 = vpop.f32.mrb[0].mxu0
        %v1439 = vadd.f32 0.0, %v1438
        %v1440 = vpop.f32.mrb[0].mxu0
        %1441 = vmatprep.mubr.f32.mxu0 0.0
        %1442 = vmatmul.mubr.f32.gmra.mrb[0].mxu0 %v1313
        %v1443 = vpop.f32.mrb[0].mxu0
        %v1444 = vadd.f32 0.0, %v1443
        %v1445 = vpop.f32.mrb[0].mxu0
        %1446 = vmatprep.mubr.f32.mxu0 0.0
        %1447 = vmatmul.mubr.f32.gmra.mrb[0].mxu0 %v1316
        %v1448 = vpop.f32.mrb[0].mxu0
        %v1449 = vadd.f32 0.0, %v1448
        %v1450 = vpop.f32.mrb[0].mxu0
        %1451 = vmatprep.mubr.f32.mxu0 0.0
        %1452 = vmatmul.mubr.f32.gmra.mrb[0].mxu0 %v1319
        %v1453 = vpop.f32.mrb[0].mxu0
        %v1454 = vadd.f32 0.0, %v1453
        %v1455 = vpop.f32.mrb[0].mxu0
        %1456 = vmatprep.mubr.f32.mxu0 0.0
        %1457 = vmatmul.mubr.f32.gmra.mrb[0].mxu0 %v1322
        %v1458 = vpop.f32.mrb[0].mxu0
        %v1459 = vadd.f32 0.0, %v1458
        %v1460 = vpop.f32.mrb[0].mxu0
        %1461 = vmatprep.mubr.f32.mxu0 0.0
        %1462 = vmatmul.mubr.f32.gmra.mrb[0].mxu0 %v1325
        %v1463 = vpop.f32.mrb[0].mxu0
        %v1464 = vadd.f32 0.0, %v1463
        %v1465 = vpop.f32.mrb[0].mxu0
        %1466 = vmatprep.mubr.f32.mxu0 0.0
        %1467 = vmatmul.mubr.f32.gmra.mrb[0].mxu0 %v1328
        %v1468 = vpop.f32.mrb[0].mxu0
        %v1469 = vadd.f32 0.0, %v1468
        %v1470 = vpop.f32.mrb[0].mxu0
        %1471 = vmatprep.mubr.f32.mxu0 0.0
        %1472 = vmatmul.mubr.f32.gmra.mrb[0].mxu0 %v1331
        %v1473 = vpop.f32.mrb[0].mxu0
        %v1474 = vadd.f32 0.0, %v1473
        %v1475 = vpop.f32.mrb[0].mxu0
        %1476 = vmatprep.mubr.f32.mxu0 0.0
        %1477 = vmatmul.mubr.f32.gmra.mrb[0].mxu0 %v1334
        %v1478 = vpop.f32.mrb[0].mxu0
        %v1479 = vadd.f32 0.0, %v1478
        %v1480 = vpop.f32.mrb[0].mxu0
        %1481 = vmatprep.mubr.f32.mxu0 0.0
        %1482 = vmatmul.mubr.f32.gmra.mrb[0].mxu0 %v1337
        %v1483 = vpop.f32.mrb[0].mxu0
        %v1484 = vadd.f32 0.0, %v1483
        %v1485 = vpop.f32.mrb[0].mxu0
        %1486 = vdwg.mxu0
        %v1487 = vadd.f32 %v1257, %v1409
        %v1488 = vadd.f32 %v1258, %v1414
        %v1489 = vadd.f32 %v1259, %v1419
        %v1490 = vadd.f32 %v1260, %v1424
        %v1491 = vadd.f32 %v1261, %v1429
        %v1492 = vadd.f32 %v1262, %v1434
        %v1493 = vadd.f32 %v1263, %v1439
        %v1494 = vadd.f32 %v1264, %v1444
        %v1495 = vadd.f32 %v1265, %v1449
        %v1496 = vadd.f32 %v1266, %v1454
        %v1497 = vadd.f32 %v1267, %v1459
        %v1498 = vadd.f32 %v1268, %v1464
        %v1499 = vadd.f32 %v1269, %v1469
        %v1500 = vadd.f32 %v1270, %v1474
        %v1501 = vadd.f32 %v1271, %v1479
        %v1502 = vadd.f32 %v1272, %v1484
        %v1503 = vld [vmem:[%s1042 + $0x2] sm:$0xff]
        %v1504 = vld [vmem:[%s1042 + $0xa] sm:$0xff]
        %v1505 = vld [vmem:[%s1042 + $0x1a] sm:$0xff]
        %v1506 = vld [vmem:[%s1042 + $0x22] sm:$0xff]
        %v1507 = vld [vmem:[%s1042 + $0x32] sm:$0xff]
        %v1508 = vld [vmem:[%s1042 + $0x3a] sm:$0xff]
        %v1509 = vld [vmem:[%s1042 + $0x4a] sm:$0xff]
        %v1510 = vld [vmem:[%s1042 + $0x52] sm:$0xff]
        %v1511 = vld [vmem:[%s1042 + $0x62] sm:$0xff]
        %v1512 = vld [vmem:[%s1042 + $0x6a] sm:$0xff]
        %v1513 = vld [vmem:[%s1042 + $0x7a] sm:$0xff]
        %v1514 = vld [vmem:[%s1042 + $0x82] sm:$0xff]
        %v1515 = vld [vmem:[%s1042 + $0x92] sm:$0xff]
        %v1516 = vld [vmem:[%s1042 + $0x9a] sm:$0xff]
        %v1517 = vld [vmem:[%s1042 + $0xaa] sm:$0xff]
        %v1518 = vld [vmem:[%s1042 + $0xb2] sm:$0xff]
        %s1519 = scalar_lea.vmem [#allocation2], 20
        %v1520 = vld [vmem:[%s1519] sm:$0xf]
        %v1522 = vsel %vm418, %v1503, 0
        %v1525 = vsel %vm418, %v1504, 0
        %v1528 = vsel %vm418, %v1505, 0
        %v1531 = vsel %vm418, %v1506, 0
        %v1534 = vsel %vm418, %v1507, 0
        %v1537 = vsel %vm418, %v1508, 0
        %v1540 = vsel %vm418, %v1509, 0
        %v1543 = vsel %vm418, %v1510, 0
        %v1546 = vsel %vm418, %v1511, 0
        %v1549 = vsel %vm418, %v1512, 0
        %v1552 = vsel %vm418, %v1513, 0
        %v1555 = vsel %vm418, %v1514, 0
        %v1558 = vsel %vm418, %v1515, 0
        %v1561 = vsel %vm418, %v1516, 0
        %v1564 = vsel %vm418, %v1517, 0
        %v1567 = vsel %vm418, %v1518, 0
        %v1570 = vsel %vm467, %v1520, 0
        %1572 = vmatprep.subr.mxu0 0.0
        %1573 = vmatpush1.msra.mxu0 %v1570
        %1574 = vmatprep.subr.mxu0 0.0
        %1575 = vmatpush1.msra.mxu0 0.0
        %1576 = vmatprep.subr.mxu0 0.0
        %1577 = vmatpush1.msra.mxu0 0.0
        %1578 = vmatprep.subr.mxu0 0.0
        %1579 = vmatpush1.msra.mxu0 0.0
        %1580 = vmatprep.subr.mxu0 0.0
        %1581 = vmatpush1.msra.mxu0 0.0
        %1582 = vmatprep.subr.mxu0 0.0
        %1583 = vmatpush1.msra.mxu0 0.0
        %1584 = vmatprep.subr.mxu0 0.0
        %1585 = vmatpush1.msra.mxu0 0.0
        %1586 = vmatprep.subr.mxu0 0.0
        %1587 = vmatpush1.msra.mxu0 0.0
        %1588 = vmatprep.subr.mxu0 0.0
        %1589 = vmatpush1.msra.mxu0 0.0
        %1590 = vmatprep.subr.mxu0 0.0
        %1591 = vmatpush1.msra.mxu0 0.0
        %1592 = vmatprep.subr.mxu0 0.0
        %1593 = vmatpush1.msra.mxu0 0.0
        %1594 = vmatprep.subr.mxu0 0.0
        %1595 = vmatpush1.msra.mxu0 0.0
        %1596 = vmatprep.subr.mxu0 0.0
        %1597 = vmatpush1.msra.mxu0 0.0
        %1598 = vmatprep.subr.mxu0 0.0
        %1599 = vmatpush1.msra.mxu0 0.0
        %1600 = vmatprep.subr.mxu0 0.0
        %1601 = vmatpush1.msra.mxu0 0.0
        %1602 = vmatprep.subr.mxu0 0.0
        %1603 = vmatpush1.msra.mxu0 0.0
        %1604 = vmatprep.subr.mxu0 0.0
        %1605 = vmatpush1.msra.mxu0 0.0
        %1606 = vmatprep.subr.mxu0 0.0
        %1607 = vmatpush1.msra.mxu0 0.0
        %1608 = vmatprep.subr.mxu0 0.0
        %1609 = vmatpush1.msra.mxu0 0.0
        %1610 = vmatprep.subr.mxu0 0.0
        %1611 = vmatpush1.msra.mxu0 0.0
        %1612 = vmatprep.subr.mxu0 0.0
        %1613 = vmatpush1.msra.mxu0 0.0
        %1614 = vmatprep.subr.mxu0 0.0
        %1615 = vmatpush1.msra.mxu0 0.0
        %1616 = vmatprep.subr.mxu0 0.0
        %1617 = vmatpush1.msra.mxu0 0.0
        %1618 = vmatprep.subr.mxu0 0.0
        %1619 = vmatpush1.msra.mxu0 0.0
        %1620 = vmatprep.subr.mxu0 0.0
        %1621 = vmatpush1.msra.mxu0 0.0
        %1622 = vmatprep.subr.mxu0 0.0
        %1623 = vmatpush1.msra.mxu0 0.0
        %1624 = vmatprep.subr.mxu0 0.0
        %1625 = vmatpush1.msra.mxu0 0.0
        %1626 = vmatprep.subr.mxu0 0.0
        %1627 = vmatpush1.msra.mxu0 0.0
        %1628 = vmatprep.subr.mxu0 0.0
        %1629 = vmatpush1.msra.mxu0 0.0
        %1630 = vmatprep.subr.mxu0 0.0
        %1631 = vmatpush1.msra.mxu0 0.0
        %1632 = vmatprep.subr.mxu0 0.0
        %1633 = vmatpush1.msra.mxu0 0.0
        %1634 = vmatprep.subr.mxu0 0.0
        %1635 = vmatpush1.msra.mxu0 0.0
        %1636 = vmatprep.mubr.f32.mxu0 0.0
        %1637 = vmatmul.mubr.f32.gmra.mrb[0].mxu0 %v1522
        %v1638 = vpop.f32.mrb[0].mxu0
        %v1639 = vadd.f32 0.0, %v1638
        %v1640 = vpop.f32.mrb[0].mxu0
        %1641 = vmatprep.mubr.f32.mxu0 0.0
        %1642 = vmatmul.mubr.f32.gmra.mrb[0].mxu0 %v1525
        %v1643 = vpop.f32.mrb[0].mxu0
        %v1644 = vadd.f32 0.0, %v1643
        %v1645 = vpop.f32.mrb[0].mxu0
        %1646 = vmatprep.mubr.f32.mxu0 0.0
        %1647 = vmatmul.mubr.f32.gmra.mrb[0].mxu0 %v1528
        %v1648 = vpop.f32.mrb[0].mxu0
        %v1649 = vadd.f32 0.0, %v1648
        %v1650 = vpop.f32.mrb[0].mxu0
        %1651 = vmatprep.mubr.f32.mxu0 0.0
        %1652 = vmatmul.mubr.f32.gmra.mrb[0].mxu0 %v1531
        %v1653 = vpop.f32.mrb[0].mxu0
        %v1654 = vadd.f32 0.0, %v1653
        %v1655 = vpop.f32.mrb[0].mxu0
        %1656 = vmatprep.mubr.f32.mxu0 0.0
        %1657 = vmatmul.mubr.f32.gmra.mrb[0].mxu0 %v1534
        %v1658 = vpop.f32.mrb[0].mxu0
        %v1659 = vadd.f32 0.0, %v1658
        %v1660 = vpop.f32.mrb[0].mxu0
        %1661 = vmatprep.mubr.f32.mxu0 0.0
        %1662 = vmatmul.mubr.f32.gmra.mrb[0].mxu0 %v1537
        %v1663 = vpop.f32.mrb[0].mxu0
        %v1664 = vadd.f32 0.0, %v1663
        %v1665 = vpop.f32.mrb[0].mxu0
        %1666 = vmatprep.mubr.f32.mxu0 0.0
        %1667 = vmatmul.mubr.f32.gmra.mrb[0].mxu0 %v1540
        %v1668 = vpop.f32.mrb[0].mxu0
        %v1669 = vadd.f32 0.0, %v1668
        %v1670 = vpop.f32.mrb[0].mxu0
        %1671 = vmatprep.mubr.f32.mxu0 0.0
        %1672 = vmatmul.mubr.f32.gmra.mrb[0].mxu0 %v1543
        %v1673 = vpop.f32.mrb[0].mxu0
        %v1674 = vadd.f32 0.0, %v1673
        %v1675 = vpop.f32.mrb[0].mxu0
        %1676 = vmatprep.mubr.f32.mxu0 0.0
        %1677 = vmatmul.mubr.f32.gmra.mrb[0].mxu0 %v1546
        %v1678 = vpop.f32.mrb[0].mxu0
        %v1679 = vadd.f32 0.0, %v1678
        %v1680 = vpop.f32.mrb[0].mxu0
        %1681 = vmatprep.mubr.f32.mxu0 0.0
        %1682 = vmatmul.mubr.f32.gmra.mrb[0].mxu0 %v1549
        %v1683 = vpop.f32.mrb[0].mxu0
        %v1684 = vadd.f32 0.0, %v1683
        %v1685 = vpop.f32.mrb[0].mxu0
        %1686 = vmatprep.mubr.f32.mxu0 0.0
        %1687 = vmatmul.mubr.f32.gmra.mrb[0].mxu0 %v1552
        %v1688 = vpop.f32.mrb[0].mxu0
        %v1689 = vadd.f32 0.0, %v1688
        %v1690 = vpop.f32.mrb[0].mxu0
        %1691 = vmatprep.mubr.f32.mxu0 0.0
        %1692 = vmatmul.mubr.f32.gmra.mrb[0].mxu0 %v1555
        %v1693 = vpop.f32.mrb[0].mxu0
        %v1694 = vadd.f32 0.0, %v1693
        %v1695 = vpop.f32.mrb[0].mxu0
        %1696 = vmatprep.mubr.f32.mxu0 0.0
        %1697 = vmatmul.mubr.f32.gmra.mrb[0].mxu0 %v1558
        %v1698 = vpop.f32.mrb[0].mxu0
        %v1699 = vadd.f32 0.0, %v1698
        %v1700 = vpop.f32.mrb[0].mxu0
        %1701 = vmatprep.mubr.f32.mxu0 0.0
        %1702 = vmatmul.mubr.f32.gmra.mrb[0].mxu0 %v1561
        %v1703 = vpop.f32.mrb[0].mxu0
        %v1704 = vadd.f32 0.0, %v1703
        %v1705 = vpop.f32.mrb[0].mxu0
        %1706 = vmatprep.mubr.f32.mxu0 0.0
        %1707 = vmatmul.mubr.f32.gmra.mrb[0].mxu0 %v1564
        %v1708 = vpop.f32.mrb[0].mxu0
        %v1709 = vadd.f32 0.0, %v1708
        %v1710 = vpop.f32.mrb[0].mxu0
        %1711 = vmatprep.mubr.f32.mxu0 0.0
        %1712 = vmatmul.mubr.f32.gmra.mrb[0].mxu0 %v1567
        %v1713 = vpop.f32.mrb[0].mxu0
        %v1714 = vadd.f32 0.0, %v1713
        %v1715 = vpop.f32.mrb[0].mxu0
        %1716 = vdwg.mxu0
        %v1717 = vadd.f32 %v1487, %v1639
        %v1718 = vadd.f32 %v1488, %v1644
        %v1719 = vadd.f32 %v1489, %v1649
        %v1720 = vadd.f32 %v1490, %v1654
        %v1721 = vadd.f32 %v1491, %v1659
        %v1722 = vadd.f32 %v1492, %v1664
        %v1723 = vadd.f32 %v1493, %v1669
        %v1724 = vadd.f32 %v1494, %v1674
        %v1725 = vadd.f32 %v1495, %v1679
        %v1726 = vadd.f32 %v1496, %v1684
        %v1727 = vadd.f32 %v1497, %v1689
        %v1728 = vadd.f32 %v1498, %v1694
        %v1729 = vadd.f32 %v1499, %v1699
        %v1730 = vadd.f32 %v1500, %v1704
        %v1731 = vadd.f32 %v1501, %v1709
        %v1732 = vadd.f32 %v1502, %v1714
        %s1733 = scalar_lea.vmem %s334, 48
        %v1734 = vld [vmem:[%s1733] sm:$0xff]
        %v1735 = vld [vmem:[%s1733 + $0x8] sm:$0xff]
        %v1736 = vld [vmem:[%s1733 + $0x18] sm:$0xff]
        %v1737 = vld [vmem:[%s1733 + $0x20] sm:$0xff]
        %v1738 = vld [vmem:[%s1733 + $0x30] sm:$0xff]
        %v1739 = vld [vmem:[%s1733 + $0x38] sm:$0xff]
        %v1740 = vld [vmem:[%s1733 + $0x48] sm:$0xff]
        %v1741 = vld [vmem:[%s1733 + $0x50] sm:$0xff]
        %v1742 = vld [vmem:[%s1733 + $0x60] sm:$0xff]
        %v1743 = vld [vmem:[%s1733 + $0x68] sm:$0xff]
        %v1744 = vld [vmem:[%s1733 + $0x78] sm:$0xff]
        %v1745 = vld [vmem:[%s1733 + $0x80] sm:$0xff]
        %v1746 = vld [vmem:[%s1733 + $0x90] sm:$0xff]
        %v1747 = vld [vmem:[%s1733 + $0x98] sm:$0xff]
        %v1748 = vld [vmem:[%s1733 + $0xa8] sm:$0xff]
        %v1749 = vld [vmem:[%s1733 + $0xb0] sm:$0xff]
        %s1750 = scalar_lea.vmem [#allocation2], 24
        %v1751 = vld [vmem:[%s1750] sm:$0xf]
        %v1753 = vsel %vm418, %v1734, 0
        %v1756 = vsel %vm418, %v1735, 0
        %v1759 = vsel %vm418, %v1736, 0
        %v1762 = vsel %vm418, %v1737, 0
        %v1765 = vsel %vm418, %v1738, 0
        %v1768 = vsel %vm418, %v1739, 0
        %v1771 = vsel %vm418, %v1740, 0
        %v1774 = vsel %vm418, %v1741, 0
        %v1777 = vsel %vm418, %v1742, 0
        %v1780 = vsel %vm418, %v1743, 0
        %v1783 = vsel %vm418, %v1744, 0
        %v1786 = vsel %vm418, %v1745, 0
        %v1789 = vsel %vm418, %v1746, 0
        %v1792 = vsel %vm418, %v1747, 0
        %v1795 = vsel %vm418, %v1748, 0
        %v1798 = vsel %vm418, %v1749, 0
        %v1801 = vsel %vm467, %v1751, 0
        %1803 = vmatprep.subr.mxu0 0.0
        %1804 = vmatpush1.msra.mxu0 %v1801
        %1805 = vmatprep.subr.mxu0 0.0
        %1806 = vmatpush1.msra.mxu0 0.0
        %1807 = vmatprep.subr.mxu0 0.0
        %1808 = vmatpush1.msra.mxu0 0.0
        %1809 = vmatprep.subr.mxu0 0.0
        %1810 = vmatpush1.msra.mxu0 0.0
        %1811 = vmatprep.subr.mxu0 0.0
        %1812 = vmatpush1.msra.mxu0 0.0
        %1813 = vmatprep.subr.mxu0 0.0
        %1814 = vmatpush1.msra.mxu0 0.0
        %1815 = vmatprep.subr.mxu0 0.0
        %1816 = vmatpush1.msra.mxu0 0.0
        %1817 = vmatprep.subr.mxu0 0.0
        %1818 = vmatpush1.msra.mxu0 0.0
        %1819 = vmatprep.subr.mxu0 0.0
        %1820 = vmatpush1.msra.mxu0 0.0
        %1821 = vmatprep.subr.mxu0 0.0
        %1822 = vmatpush1.msra.mxu0 0.0
        %1823 = vmatprep.subr.mxu0 0.0
        %1824 = vmatpush1.msra.mxu0 0.0
        %1825 = vmatprep.subr.mxu0 0.0
        %1826 = vmatpush1.msra.mxu0 0.0
        %1827 = vmatprep.subr.mxu0 0.0
        %1828 = vmatpush1.msra.mxu0 0.0
        %1829 = vmatprep.subr.mxu0 0.0
        %1830 = vmatpush1.msra.mxu0 0.0
        %1831 = vmatprep.subr.mxu0 0.0
        %1832 = vmatpush1.msra.mxu0 0.0
        %1833 = vmatprep.subr.mxu0 0.0
        %1834 = vmatpush1.msra.mxu0 0.0
        %1835 = vmatprep.subr.mxu0 0.0
        %1836 = vmatpush1.msra.mxu0 0.0
        %1837 = vmatprep.subr.mxu0 0.0
        %1838 = vmatpush1.msra.mxu0 0.0
        %1839 = vmatprep.subr.mxu0 0.0
        %1840 = vmatpush1.msra.mxu0 0.0
        %1841 = vmatprep.subr.mxu0 0.0
        %1842 = vmatpush1.msra.mxu0 0.0
        %1843 = vmatprep.subr.mxu0 0.0
        %1844 = vmatpush1.msra.mxu0 0.0
        %1845 = vmatprep.subr.mxu0 0.0
        %1846 = vmatpush1.msra.mxu0 0.0
        %1847 = vmatprep.subr.mxu0 0.0
        %1848 = vmatpush1.msra.mxu0 0.0
        %1849 = vmatprep.subr.mxu0 0.0
        %1850 = vmatpush1.msra.mxu0 0.0
        %1851 = vmatprep.subr.mxu0 0.0
        %1852 = vmatpush1.msra.mxu0 0.0
        %1853 = vmatprep.subr.mxu0 0.0
        %1854 = vmatpush1.msra.mxu0 0.0
        %1855 = vmatprep.subr.mxu0 0.0
        %1856 = vmatpush1.msra.mxu0 0.0
        %1857 = vmatprep.subr.mxu0 0.0
        %1858 = vmatpush1.msra.mxu0 0.0
        %1859 = vmatprep.subr.mxu0 0.0
        %1860 = vmatpush1.msra.mxu0 0.0
        %1861 = vmatprep.subr.mxu0 0.0
        %1862 = vmatpush1.msra.mxu0 0.0
        %1863 = vmatprep.subr.mxu0 0.0
        %1864 = vmatpush1.msra.mxu0 0.0
        %1865 = vmatprep.subr.mxu0 0.0
        %1866 = vmatpush1.msra.mxu0 0.0
        %1867 = vmatprep.mubr.f32.mxu0 0.0
        %1868 = vmatmul.mubr.f32.gmra.mrb[0].mxu0 %v1753
        %v1869 = vpop.f32.mrb[0].mxu0
        %v1870 = vadd.f32 0.0, %v1869
        %v1871 = vpop.f32.mrb[0].mxu0
        %1872 = vmatprep.mubr.f32.mxu0 0.0
        %1873 = vmatmul.mubr.f32.gmra.mrb[0].mxu0 %v1756
        %v1874 = vpop.f32.mrb[0].mxu0
        %v1875 = vadd.f32 0.0, %v1874
        %v1876 = vpop.f32.mrb[0].mxu0
        %1877 = vmatprep.mubr.f32.mxu0 0.0
        %1878 = vmatmul.mubr.f32.gmra.mrb[0].mxu0 %v1759
        %v1879 = vpop.f32.mrb[0].mxu0
        %v1880 = vadd.f32 0.0, %v1879
        %v1881 = vpop.f32.mrb[0].mxu0
        %1882 = vmatprep.mubr.f32.mxu0 0.0
        %1883 = vmatmul.mubr.f32.gmra.mrb[0].mxu0 %v1762
        %v1884 = vpop.f32.mrb[0].mxu0
        %v1885 = vadd.f32 0.0, %v1884
        %v1886 = vpop.f32.mrb[0].mxu0
        %1887 = vmatprep.mubr.f32.mxu0 0.0
        %1888 = vmatmul.mubr.f32.gmra.mrb[0].mxu0 %v1765
        %v1889 = vpop.f32.mrb[0].mxu0
        %v1890 = vadd.f32 0.0, %v1889
        %v1891 = vpop.f32.mrb[0].mxu0
        %1892 = vmatprep.mubr.f32.mxu0 0.0
        %1893 = vmatmul.mubr.f32.gmra.mrb[0].mxu0 %v1768
        %v1894 = vpop.f32.mrb[0].mxu0
        %v1895 = vadd.f32 0.0, %v1894
        %v1896 = vpop.f32.mrb[0].mxu0
        %1897 = vmatprep.mubr.f32.mxu0 0.0
        %1898 = vmatmul.mubr.f32.gmra.mrb[0].mxu0 %v1771
        %v1899 = vpop.f32.mrb[0].mxu0
        %v1900 = vadd.f32 0.0, %v1899
        %v1901 = vpop.f32.mrb[0].mxu0
        %1902 = vmatprep.mubr.f32.mxu0 0.0
        %1903 = vmatmul.mubr.f32.gmra.mrb[0].mxu0 %v1774
        %v1904 = vpop.f32.mrb[0].mxu0
        %v1905 = vadd.f32 0.0, %v1904
        %v1906 = vpop.f32.mrb[0].mxu0
        %1907 = vmatprep.mubr.f32.mxu0 0.0
        %1908 = vmatmul.mubr.f32.gmra.mrb[0].mxu0 %v1777
        %v1909 = vpop.f32.mrb[0].mxu0
        %v1910 = vadd.f32 0.0, %v1909
        %v1911 = vpop.f32.mrb[0].mxu0
        %1912 = vmatprep.mubr.f32.mxu0 0.0
        %1913 = vmatmul.mubr.f32.gmra.mrb[0].mxu0 %v1780
        %v1914 = vpop.f32.mrb[0].mxu0
        %v1915 = vadd.f32 0.0, %v1914
        %v1916 = vpop.f32.mrb[0].mxu0
        %1917 = vmatprep.mubr.f32.mxu0 0.0
        %1918 = vmatmul.mubr.f32.gmra.mrb[0].mxu0 %v1783
        %v1919 = vpop.f32.mrb[0].mxu0
        %v1920 = vadd.f32 0.0, %v1919
        %v1921 = vpop.f32.mrb[0].mxu0
        %1922 = vmatprep.mubr.f32.mxu0 0.0
        %1923 = vmatmul.mubr.f32.gmra.mrb[0].mxu0 %v1786
        %v1924 = vpop.f32.mrb[0].mxu0
        %v1925 = vadd.f32 0.0, %v1924
        %v1926 = vpop.f32.mrb[0].mxu0
        %1927 = vmatprep.mubr.f32.mxu0 0.0
        %1928 = vmatmul.mubr.f32.gmra.mrb[0].mxu0 %v1789
        %v1929 = vpop.f32.mrb[0].mxu0
        %v1930 = vadd.f32 0.0, %v1929
        %v1931 = vpop.f32.mrb[0].mxu0
        %1932 = vmatprep.mubr.f32.mxu0 0.0
        %1933 = vmatmul.mubr.f32.gmra.mrb[0].mxu0 %v1792
        %v1934 = vpop.f32.mrb[0].mxu0
        %v1935 = vadd.f32 0.0, %v1934
        %v1936 = vpop.f32.mrb[0].mxu0
        %1937 = vmatprep.mubr.f32.mxu0 0.0
        %1938 = vmatmul.mubr.f32.gmra.mrb[0].mxu0 %v1795
        %v1939 = vpop.f32.mrb[0].mxu0
        %v1940 = vadd.f32 0.0, %v1939
        %v1941 = vpop.f32.mrb[0].mxu0
        %1942 = vmatprep.mubr.f32.mxu0 0.0
        %1943 = vmatmul.mubr.f32.gmra.mrb[0].mxu0 %v1798
        %v1944 = vpop.f32.mrb[0].mxu0
        %v1945 = vadd.f32 0.0, %v1944
        %v1946 = vpop.f32.mrb[0].mxu0
        %1947 = vdwg.mxu0
        %v1948 = vadd.f32 %v1717, %v1870
        %v1949 = vadd.f32 %v1718, %v1875
        %v1950 = vadd.f32 %v1719, %v1880
        %v1951 = vadd.f32 %v1720, %v1885
        %v1952 = vadd.f32 %v1721, %v1890
        %v1953 = vadd.f32 %v1722, %v1895
        %v1954 = vadd.f32 %v1723, %v1900
        %v1955 = vadd.f32 %v1724, %v1905
        %v1956 = vadd.f32 %v1725, %v1910
        %v1957 = vadd.f32 %v1726, %v1915
        %v1958 = vadd.f32 %v1727, %v1920
        %v1959 = vadd.f32 %v1728, %v1925
        %v1960 = vadd.f32 %v1729, %v1930
        %v1961 = vadd.f32 %v1730, %v1935
        %v1962 = vadd.f32 %v1731, %v1940
        %v1963 = vadd.f32 %v1732, %v1945
        %v1964 = vld [vmem:[%s1733 + $0x1] sm:$0xff]
        %v1965 = vld [vmem:[%s1733 + $0x9] sm:$0xff]
        %v1966 = vld [vmem:[%s1733 + $0x19] sm:$0xff]
        %v1967 = vld [vmem:[%s1733 + $0x21] sm:$0xff]
        %v1968 = vld [vmem:[%s1733 + $0x31] sm:$0xff]
        %v1969 = vld [vmem:[%s1733 + $0x39] sm:$0xff]
        %v1970 = vld [vmem:[%s1733 + $0x49] sm:$0xff]
        %v1971 = vld [vmem:[%s1733 + $0x51] sm:$0xff]
        %v1972 = vld [vmem:[%s1733 + $0x61] sm:$0xff]
        %v1973 = vld [vmem:[%s1733 + $0x69] sm:$0xff]
        %v1974 = vld [vmem:[%s1733 + $0x79] sm:$0xff]
        %v1975 = vld [vmem:[%s1733 + $0x81] sm:$0xff]
        %v1976 = vld [vmem:[%s1733 + $0x91] sm:$0xff]
        %v1977 = vld [vmem:[%s1733 + $0x99] sm:$0xff]
        %v1978 = vld [vmem:[%s1733 + $0xa9] sm:$0xff]
        %v1979 = vld [vmem:[%s1733 + $0xb1] sm:$0xff]
        %s1980 = scalar_lea.vmem [#allocation2], 28
        %v1981 = vld [vmem:[%s1980] sm:$0xf]
        %v1983 = vsel %vm418, %v1964, 0
        %v1986 = vsel %vm418, %v1965, 0
        %v1989 = vsel %vm418, %v1966, 0
        %v1992 = vsel %vm418, %v1967, 0
        %v1995 = vsel %vm418, %v1968, 0
        %v1998 = vsel %vm418, %v1969, 0
        %v2001 = vsel %vm418, %v1970, 0
        %v2004 = vsel %vm418, %v1971, 0
        %v2007 = vsel %vm418, %v1972, 0
        %v2010 = vsel %vm418, %v1973, 0
        %v2013 = vsel %vm418, %v1974, 0
        %v2016 = vsel %vm418, %v1975, 0
        %v2019 = vsel %vm418, %v1976, 0
        %v2022 = vsel %vm418, %v1977, 0
        %v2025 = vsel %vm418, %v1978, 0
        %v2028 = vsel %vm418, %v1979, 0
        %v2031 = vsel %vm467, %v1981, 0
        %2033 = vmatprep.subr.mxu0 0.0
        %2034 = vmatpush1.msra.mxu0 %v2031
        %2035 = vmatprep.subr.mxu0 0.0
        %2036 = vmatpush1.msra.mxu0 0.0
        %2037 = vmatprep.subr.mxu0 0.0
        %2038 = vmatpush1.msra.mxu0 0.0
        %2039 = vmatprep.subr.mxu0 0.0
        %2040 = vmatpush1.msra.mxu0 0.0
        %2041 = vmatprep.subr.mxu0 0.0
        %2042 = vmatpush1.msra.mxu0 0.0
        %2043 = vmatprep.subr.mxu0 0.0
        %2044 = vmatpush1.msra.mxu0 0.0
        %2045 = vmatprep.subr.mxu0 0.0
        %2046 = vmatpush1.msra.mxu0 0.0
        %2047 = vmatprep.subr.mxu0 0.0
        %2048 = vmatpush1.msra.mxu0 0.0
        %2049 = vmatprep.subr.mxu0 0.0
        %2050 = vmatpush1.msra.mxu0 0.0
        %2051 = vmatprep.subr.mxu0 0.0
        %2052 = vmatpush1.msra.mxu0 0.0
        %2053 = vmatprep.subr.mxu0 0.0
        %2054 = vmatpush1.msra.mxu0 0.0
        %2055 = vmatprep.subr.mxu0 0.0
        %2056 = vmatpush1.msra.mxu0 0.0
        %2057 = vmatprep.subr.mxu0 0.0
        %2058 = vmatpush1.msra.mxu0 0.0
        %2059 = vmatprep.subr.mxu0 0.0
        %2060 = vmatpush1.msra.mxu0 0.0
        %2061 = vmatprep.subr.mxu0 0.0
        %2062 = vmatpush1.msra.mxu0 0.0
        %2063 = vmatprep.subr.mxu0 0.0
        %2064 = vmatpush1.msra.mxu0 0.0
        %2065 = vmatprep.subr.mxu0 0.0
        %2066 = vmatpush1.msra.mxu0 0.0
        %2067 = vmatprep.subr.mxu0 0.0
        %2068 = vmatpush1.msra.mxu0 0.0
        %2069 = vmatprep.subr.mxu0 0.0
        %2070 = vmatpush1.msra.mxu0 0.0
        %2071 = vmatprep.subr.mxu0 0.0
        %2072 = vmatpush1.msra.mxu0 0.0
        %2073 = vmatprep.subr.mxu0 0.0
        %2074 = vmatpush1.msra.mxu0 0.0
        %2075 = vmatprep.subr.mxu0 0.0
        %2076 = vmatpush1.msra.mxu0 0.0
        %2077 = vmatprep.subr.mxu0 0.0
        %2078 = vmatpush1.msra.mxu0 0.0
        %2079 = vmatprep.subr.mxu0 0.0
        %2080 = vmatpush1.msra.mxu0 0.0
        %2081 = vmatprep.subr.mxu0 0.0
        %2082 = vmatpush1.msra.mxu0 0.0
        %2083 = vmatprep.subr.mxu0 0.0
        %2084 = vmatpush1.msra.mxu0 0.0
        %2085 = vmatprep.subr.mxu0 0.0
        %2086 = vmatpush1.msra.mxu0 0.0
        %2087 = vmatprep.subr.mxu0 0.0
        %2088 = vmatpush1.msra.mxu0 0.0
        %2089 = vmatprep.subr.mxu0 0.0
        %2090 = vmatpush1.msra.mxu0 0.0
        %2091 = vmatprep.subr.mxu0 0.0
        %2092 = vmatpush1.msra.mxu0 0.0
        %2093 = vmatprep.subr.mxu0 0.0
        %2094 = vmatpush1.msra.mxu0 0.0
        %2095 = vmatprep.subr.mxu0 0.0
        %2096 = vmatpush1.msra.mxu0 0.0
        %2097 = vmatprep.mubr.f32.mxu0 0.0
        %2098 = vmatmul.mubr.f32.gmra.mrb[0].mxu0 %v1983
        %v2099 = vpop.f32.mrb[0].mxu0
        %v2100 = vadd.f32 0.0, %v2099
        %v2101 = vpop.f32.mrb[0].mxu0
        %2102 = vmatprep.mubr.f32.mxu0 0.0
        %2103 = vmatmul.mubr.f32.gmra.mrb[0].mxu0 %v1986
        %v2104 = vpop.f32.mrb[0].mxu0
        %v2105 = vadd.f32 0.0, %v2104
        %v2106 = vpop.f32.mrb[0].mxu0
        %2107 = vmatprep.mubr.f32.mxu0 0.0
        %2108 = vmatmul.mubr.f32.gmra.mrb[0].mxu0 %v1989
        %v2109 = vpop.f32.mrb[0].mxu0
        %v2110 = vadd.f32 0.0, %v2109
        %v2111 = vpop.f32.mrb[0].mxu0
        %2112 = vmatprep.mubr.f32.mxu0 0.0
        %2113 = vmatmul.mubr.f32.gmra.mrb[0].mxu0 %v1992
        %v2114 = vpop.f32.mrb[0].mxu0
        %v2115 = vadd.f32 0.0, %v2114
        %v2116 = vpop.f32.mrb[0].mxu0
        %2117 = vmatprep.mubr.f32.mxu0 0.0
        %2118 = vmatmul.mubr.f32.gmra.mrb[0].mxu0 %v1995
        %v2119 = vpop.f32.mrb[0].mxu0
        %v2120 = vadd.f32 0.0, %v2119
        %v2121 = vpop.f32.mrb[0].mxu0
        %2122 = vmatprep.mubr.f32.mxu0 0.0
        %2123 = vmatmul.mubr.f32.gmra.mrb[0].mxu0 %v1998
        %v2124 = vpop.f32.mrb[0].mxu0
        %v2125 = vadd.f32 0.0, %v2124
        %v2126 = vpop.f32.mrb[0].mxu0
        %2127 = vmatprep.mubr.f32.mxu0 0.0
        %2128 = vmatmul.mubr.f32.gmra.mrb[0].mxu0 %v2001
        %v2129 = vpop.f32.mrb[0].mxu0
        %v2130 = vadd.f32 0.0, %v2129
        %v2131 = vpop.f32.mrb[0].mxu0
        %2132 = vmatprep.mubr.f32.mxu0 0.0
        %2133 = vmatmul.mubr.f32.gmra.mrb[0].mxu0 %v2004
        %v2134 = vpop.f32.mrb[0].mxu0
        %v2135 = vadd.f32 0.0, %v2134
        %v2136 = vpop.f32.mrb[0].mxu0
        %2137 = vmatprep.mubr.f32.mxu0 0.0
        %2138 = vmatmul.mubr.f32.gmra.mrb[0].mxu0 %v2007
        %v2139 = vpop.f32.mrb[0].mxu0
        %v2140 = vadd.f32 0.0, %v2139
        %v2141 = vpop.f32.mrb[0].mxu0
        %2142 = vmatprep.mubr.f32.mxu0 0.0
        %2143 = vmatmul.mubr.f32.gmra.mrb[0].mxu0 %v2010
        %v2144 = vpop.f32.mrb[0].mxu0
        %v2145 = vadd.f32 0.0, %v2144
        %v2146 = vpop.f32.mrb[0].mxu0
        %2147 = vmatprep.mubr.f32.mxu0 0.0
        %2148 = vmatmul.mubr.f32.gmra.mrb[0].mxu0 %v2013
        %v2149 = vpop.f32.mrb[0].mxu0
        %v2150 = vadd.f32 0.0, %v2149
        %v2151 = vpop.f32.mrb[0].mxu0
        %2152 = vmatprep.mubr.f32.mxu0 0.0
        %2153 = vmatmul.mubr.f32.gmra.mrb[0].mxu0 %v2016
        %v2154 = vpop.f32.mrb[0].mxu0
        %v2155 = vadd.f32 0.0, %v2154
        %v2156 = vpop.f32.mrb[0].mxu0
        %2157 = vmatprep.mubr.f32.mxu0 0.0
        %2158 = vmatmul.mubr.f32.gmra.mrb[0].mxu0 %v2019
        %v2159 = vpop.f32.mrb[0].mxu0
        %v2160 = vadd.f32 0.0, %v2159
        %v2161 = vpop.f32.mrb[0].mxu0
        %2162 = vmatprep.mubr.f32.mxu0 0.0
        %2163 = vmatmul.mubr.f32.gmra.mrb[0].mxu0 %v2022
        %v2164 = vpop.f32.mrb[0].mxu0
        %v2165 = vadd.f32 0.0, %v2164
        %v2166 = vpop.f32.mrb[0].mxu0
        %2167 = vmatprep.mubr.f32.mxu0 0.0
        %2168 = vmatmul.mubr.f32.gmra.mrb[0].mxu0 %v2025
        %v2169 = vpop.f32.mrb[0].mxu0
        %v2170 = vadd.f32 0.0, %v2169
        %v2171 = vpop.f32.mrb[0].mxu0
        %2172 = vmatprep.mubr.f32.mxu0 0.0
        %2173 = vmatmul.mubr.f32.gmra.mrb[0].mxu0 %v2028
        %v2174 = vpop.f32.mrb[0].mxu0
        %v2175 = vadd.f32 0.0, %v2174
        %v2176 = vpop.f32.mrb[0].mxu0
        %2177 = vdwg.mxu0
        %v2178 = vadd.f32 %v1948, %v2100
        %v2179 = vadd.f32 %v1949, %v2105
        %v2180 = vadd.f32 %v1950, %v2110
        %v2181 = vadd.f32 %v1951, %v2115
        %v2182 = vadd.f32 %v1952, %v2120
        %v2183 = vadd.f32 %v1953, %v2125
        %v2184 = vadd.f32 %v1954, %v2130
        %v2185 = vadd.f32 %v1955, %v2135
        %v2186 = vadd.f32 %v1956, %v2140
        %v2187 = vadd.f32 %v1957, %v2145
        %v2188 = vadd.f32 %v1958, %v2150
        %v2189 = vadd.f32 %v1959, %v2155
        %v2190 = vadd.f32 %v1960, %v2160
        %v2191 = vadd.f32 %v1961, %v2165
        %v2192 = vadd.f32 %v1962, %v2170
        %v2193 = vadd.f32 %v1963, %v2175
        %v2194 = vld [vmem:[%s1733 + $0x2] sm:$0xff]
        %v2195 = vld [vmem:[%s1733 + $0xa] sm:$0xff]
        %v2196 = vld [vmem:[%s1733 + $0x1a] sm:$0xff]
        %v2197 = vld [vmem:[%s1733 + $0x22] sm:$0xff]
        %v2198 = vld [vmem:[%s1733 + $0x32] sm:$0xff]
        %v2199 = vld [vmem:[%s1733 + $0x3a] sm:$0xff]
        %v2200 = vld [vmem:[%s1733 + $0x4a] sm:$0xff]
        %v2201 = vld [vmem:[%s1733 + $0x52] sm:$0xff]
        %v2202 = vld [vmem:[%s1733 + $0x62] sm:$0xff]
        %v2203 = vld [vmem:[%s1733 + $0x6a] sm:$0xff]
        %v2204 = vld [vmem:[%s1733 + $0x7a] sm:$0xff]
        %v2205 = vld [vmem:[%s1733 + $0x82] sm:$0xff]
        %v2206 = vld [vmem:[%s1733 + $0x92] sm:$0xff]
        %v2207 = vld [vmem:[%s1733 + $0x9a] sm:$0xff]
        %v2208 = vld [vmem:[%s1733 + $0xaa] sm:$0xff]
        %v2209 = vld [vmem:[%s1733 + $0xb2] sm:$0xff]
        %s2210 = scalar_lea.vmem [#allocation2], 32
        %v2211 = vld [vmem:[%s2210] sm:$0xf]
        %v2213 = vsel %vm418, %v2194, 0
        %v2216 = vsel %vm418, %v2195, 0
        %v2219 = vsel %vm418, %v2196, 0
        %v2222 = vsel %vm418, %v2197, 0
        %v2225 = vsel %vm418, %v2198, 0
        %v2228 = vsel %vm418, %v2199, 0
        %v2231 = vsel %vm418, %v2200, 0
        %v2234 = vsel %vm418, %v2201, 0
        %v2237 = vsel %vm418, %v2202, 0
        %v2240 = vsel %vm418, %v2203, 0
        %v2243 = vsel %vm418, %v2204, 0
        %v2246 = vsel %vm418, %v2205, 0
        %v2249 = vsel %vm418, %v2206, 0
        %v2252 = vsel %vm418, %v2207, 0
        %v2255 = vsel %vm418, %v2208, 0
        %v2258 = vsel %vm418, %v2209, 0
        %v2261 = vsel %vm467, %v2211, 0
        %2263 = vmatprep.subr.mxu0 0.0
        %2264 = vmatpush1.msra.mxu0 %v2261
        %2265 = vmatprep.subr.mxu0 0.0
        %2266 = vmatpush1.msra.mxu0 0.0
        %2267 = vmatprep.subr.mxu0 0.0
        %2268 = vmatpush1.msra.mxu0 0.0
        %2269 = vmatprep.subr.mxu0 0.0
        %2270 = vmatpush1.msra.mxu0 0.0
        %2271 = vmatprep.subr.mxu0 0.0
        %2272 = vmatpush1.msra.mxu0 0.0
        %2273 = vmatprep.subr.mxu0 0.0
        %2274 = vmatpush1.msra.mxu0 0.0
        %2275 = vmatprep.subr.mxu0 0.0
        %2276 = vmatpush1.msra.mxu0 0.0
        %2277 = vmatprep.subr.mxu0 0.0
        %2278 = vmatpush1.msra.mxu0 0.0
        %2279 = vmatprep.subr.mxu0 0.0
        %2280 = vmatpush1.msra.mxu0 0.0
        %2281 = vmatprep.subr.mxu0 0.0
        %2282 = vmatpush1.msra.mxu0 0.0
        %2283 = vmatprep.subr.mxu0 0.0
        %2284 = vmatpush1.msra.mxu0 0.0
        %2285 = vmatprep.subr.mxu0 0.0
        %2286 = vmatpush1.msra.mxu0 0.0
        %2287 = vmatprep.subr.mxu0 0.0
        %2288 = vmatpush1.msra.mxu0 0.0
        %2289 = vmatprep.subr.mxu0 0.0
        %2290 = vmatpush1.msra.mxu0 0.0
        %2291 = vmatprep.subr.mxu0 0.0
        %2292 = vmatpush1.msra.mxu0 0.0
        %2293 = vmatprep.subr.mxu0 0.0
        %2294 = vmatpush1.msra.mxu0 0.0
        %2295 = vmatprep.subr.mxu0 0.0
        %2296 = vmatpush1.msra.mxu0 0.0
        %2297 = vmatprep.subr.mxu0 0.0
        %2298 = vmatpush1.msra.mxu0 0.0
        %2299 = vmatprep.subr.mxu0 0.0
        %2300 = vmatpush1.msra.mxu0 0.0
        %2301 = vmatprep.subr.mxu0 0.0
        %2302 = vmatpush1.msra.mxu0 0.0
        %2303 = vmatprep.subr.mxu0 0.0
        %2304 = vmatpush1.msra.mxu0 0.0
        %2305 = vmatprep.subr.mxu0 0.0
        %2306 = vmatpush1.msra.mxu0 0.0
        %2307 = vmatprep.subr.mxu0 0.0
        %2308 = vmatpush1.msra.mxu0 0.0
        %2309 = vmatprep.subr.mxu0 0.0
        %2310 = vmatpush1.msra.mxu0 0.0
        %2311 = vmatprep.subr.mxu0 0.0
        %2312 = vmatpush1.msra.mxu0 0.0
        %2313 = vmatprep.subr.mxu0 0.0
        %2314 = vmatpush1.msra.mxu0 0.0
        %2315 = vmatprep.subr.mxu0 0.0
        %2316 = vmatpush1.msra.mxu0 0.0
        %2317 = vmatprep.subr.mxu0 0.0
        %2318 = vmatpush1.msra.mxu0 0.0
        %2319 = vmatprep.subr.mxu0 0.0
        %2320 = vmatpush1.msra.mxu0 0.0
        %2321 = vmatprep.subr.mxu0 0.0
        %2322 = vmatpush1.msra.mxu0 0.0
        %2323 = vmatprep.subr.mxu0 0.0
        %2324 = vmatpush1.msra.mxu0 0.0
        %2325 = vmatprep.subr.mxu0 0.0
        %2326 = vmatpush1.msra.mxu0 0.0
        %2327 = vmatprep.mubr.f32.mxu0 0.0
        %2328 = vmatmul.mubr.f32.gmra.mrb[0].mxu0 %v2213
        %v2329 = vpop.f32.mrb[0].mxu0
        %v2330 = vadd.f32 0.0, %v2329
        %v2331 = vpop.f32.mrb[0].mxu0
        %2332 = vmatprep.mubr.f32.mxu0 0.0
        %2333 = vmatmul.mubr.f32.gmra.mrb[0].mxu0 %v2216
        %v2334 = vpop.f32.mrb[0].mxu0
        %v2335 = vadd.f32 0.0, %v2334
        %v2336 = vpop.f32.mrb[0].mxu0
        %2337 = vmatprep.mubr.f32.mxu0 0.0
        %2338 = vmatmul.mubr.f32.gmra.mrb[0].mxu0 %v2219
        %v2339 = vpop.f32.mrb[0].mxu0
        %v2340 = vadd.f32 0.0, %v2339
        %v2341 = vpop.f32.mrb[0].mxu0
        %2342 = vmatprep.mubr.f32.mxu0 0.0
        %2343 = vmatmul.mubr.f32.gmra.mrb[0].mxu0 %v2222
        %v2344 = vpop.f32.mrb[0].mxu0
        %v2345 = vadd.f32 0.0, %v2344
        %v2346 = vpop.f32.mrb[0].mxu0
        %2347 = vmatprep.mubr.f32.mxu0 0.0
        %2348 = vmatmul.mubr.f32.gmra.mrb[0].mxu0 %v2225
        %v2349 = vpop.f32.mrb[0].mxu0
        %v2350 = vadd.f32 0.0, %v2349
        %v2351 = vpop.f32.mrb[0].mxu0
        %2352 = vmatprep.mubr.f32.mxu0 0.0
        %2353 = vmatmul.mubr.f32.gmra.mrb[0].mxu0 %v2228
        %v2354 = vpop.f32.mrb[0].mxu0
        %v2355 = vadd.f32 0.0, %v2354
        %v2356 = vpop.f32.mrb[0].mxu0
        %2357 = vmatprep.mubr.f32.mxu0 0.0
        %2358 = vmatmul.mubr.f32.gmra.mrb[0].mxu0 %v2231
        %v2359 = vpop.f32.mrb[0].mxu0
        %v2360 = vadd.f32 0.0, %v2359
        %v2361 = vpop.f32.mrb[0].mxu0
        %2362 = vmatprep.mubr.f32.mxu0 0.0
        %2363 = vmatmul.mubr.f32.gmra.mrb[0].mxu0 %v2234
        %v2364 = vpop.f32.mrb[0].mxu0
        %v2365 = vadd.f32 0.0, %v2364
        %v2366 = vpop.f32.mrb[0].mxu0
        %2367 = vmatprep.mubr.f32.mxu0 0.0
        %2368 = vmatmul.mubr.f32.gmra.mrb[0].mxu0 %v2237
        %v2369 = vpop.f32.mrb[0].mxu0
        %v2370 = vadd.f32 0.0, %v2369
        %v2371 = vpop.f32.mrb[0].mxu0
        %2372 = vmatprep.mubr.f32.mxu0 0.0
        %2373 = vmatmul.mubr.f32.gmra.mrb[0].mxu0 %v2240
        %v2374 = vpop.f32.mrb[0].mxu0
        %v2375 = vadd.f32 0.0, %v2374
        %v2376 = vpop.f32.mrb[0].mxu0
        %2377 = vmatprep.mubr.f32.mxu0 0.0
        %2378 = vmatmul.mubr.f32.gmra.mrb[0].mxu0 %v2243
        %v2379 = vpop.f32.mrb[0].mxu0
        %v2380 = vadd.f32 0.0, %v2379
        %v2381 = vpop.f32.mrb[0].mxu0
        %2382 = vmatprep.mubr.f32.mxu0 0.0
        %2383 = vmatmul.mubr.f32.gmra.mrb[0].mxu0 %v2246
        %v2384 = vpop.f32.mrb[0].mxu0
        %v2385 = vadd.f32 0.0, %v2384
        %v2386 = vpop.f32.mrb[0].mxu0
        %2387 = vmatprep.mubr.f32.mxu0 0.0
        %2388 = vmatmul.mubr.f32.gmra.mrb[0].mxu0 %v2249
        %v2389 = vpop.f32.mrb[0].mxu0
        %v2390 = vadd.f32 0.0, %v2389
        %v2391 = vpop.f32.mrb[0].mxu0
        %2392 = vmatprep.mubr.f32.mxu0 0.0
        %2393 = vmatmul.mubr.f32.gmra.mrb[0].mxu0 %v2252
        %v2394 = vpop.f32.mrb[0].mxu0
        %v2395 = vadd.f32 0.0, %v2394
        %v2396 = vpop.f32.mrb[0].mxu0
        %2397 = vmatprep.mubr.f32.mxu0 0.0
        %2398 = vmatmul.mubr.f32.gmra.mrb[0].mxu0 %v2255
        %v2399 = vpop.f32.mrb[0].mxu0
        %v2400 = vadd.f32 0.0, %v2399
        %v2401 = vpop.f32.mrb[0].mxu0
        %2402 = vmatprep.mubr.f32.mxu0 0.0
        %2403 = vmatmul.mubr.f32.gmra.mrb[0].mxu0 %v2258
        %v2404 = vpop.f32.mrb[0].mxu0
        %v2405 = vadd.f32 0.0, %v2404
        %v2406 = vpop.f32.mrb[0].mxu0
        %2407 = vdwg.mxu0
        %v2408 = vadd.f32 %v2178, %v2330
        %v2409 = vadd.f32 %v2179, %v2335
        %v2410 = vadd.f32 %v2180, %v2340
        %v2411 = vadd.f32 %v2181, %v2345
        %v2412 = vadd.f32 %v2182, %v2350
        %v2413 = vadd.f32 %v2183, %v2355
        %v2414 = vadd.f32 %v2184, %v2360
        %v2415 = vadd.f32 %v2185, %v2365
        %v2416 = vadd.f32 %v2186, %v2370
        %v2417 = vadd.f32 %v2187, %v2375
        %v2418 = vadd.f32 %v2188, %v2380
        %v2419 = vadd.f32 %v2189, %v2385
        %v2420 = vadd.f32 %v2190, %v2390
        %v2421 = vadd.f32 %v2191, %v2395
        %v2422 = vadd.f32 %v2192, %v2400
        %v2423 = vadd.f32 %v2193, %v2405
        %v2424 = vld [vmem:[%s325] sm:$0x1]
        %v2426 = vlaneseq
        %v2427 = vshrl.u32 %v2426, 7
        %v2428 = vsub.s32 0, %v2427
        %v2429 = vrot.slane %v2424, %v2428
        %v2431 = vmul.f32 %v2408, %v2429
        %v2432 = vmul.f32 %v2409, %v2429
        %v2433 = vmul.f32 %v2410, %v2429
        %v2434 = vmul.f32 %v2411, %v2429
        %v2435 = vmul.f32 %v2412, %v2429
        %v2436 = vmul.f32 %v2413, %v2429
        %v2437 = vmul.f32 %v2414, %v2429
        %v2438 = vmul.f32 %v2415, %v2429
        %v2439 = vmul.f32 %v2416, %v2429
        %v2440 = vmul.f32 %v2417, %v2429
        %v2441 = vmul.f32 %v2418, %v2429
        %v2442 = vmul.f32 %v2419, %v2429
        %v2443 = vmul.f32 %v2420, %v2429
        %v2444 = vmul.f32 %v2421, %v2429
        %v2445 = vmul.f32 %v2422, %v2429
        %v2446 = vmul.f32 %v2423, %v2429
        %v2447 = vld [vmem:[%s343] sm:$0xff]
        %v2448 = vld [vmem:[%s343 + $0x8] sm:$0xff]
        %v2449 = vld [vmem:[%s343 + $0x10] sm:$0xff]
        %v2450 = vld [vmem:[%s343 + $0x18] sm:$0xff]
        %v2451 = vld [vmem:[%s343 + $0x20] sm:$0xff]
        %v2452 = vld [vmem:[%s343 + $0x28] sm:$0xff]
        %v2453 = vld [vmem:[%s343 + $0x30] sm:$0xff]
        %v2454 = vld [vmem:[%s343 + $0x38] sm:$0xff]
        %v2455 = vld [vmem:[%s343 + $0x40] sm:$0xff]
        %v2456 = vld [vmem:[%s343 + $0x48] sm:$0xff]
        %v2457 = vld [vmem:[%s343 + $0x50] sm:$0xff]
        %v2458 = vld [vmem:[%s343 + $0x58] sm:$0xff]
        %v2459 = vld [vmem:[%s343 + $0x60] sm:$0xff]
        %v2460 = vld [vmem:[%s343 + $0x68] sm:$0xff]
        %v2461 = vld [vmem:[%s343 + $0x70] sm:$0xff]
        %v2462 = vld [vmem:[%s343 + $0x78] sm:$0xff]
        %2464 = vset.pattern.permute.xlu0 0
        %2465 = vperm.xlu0 %2464, %v2447
        %v2466 = vpop.permute.xlu0 %2465
        %2469 = vset.pattern.permute.xlu0 0
        %2470 = vperm.xlu0 %2469, %v2448
        %v2471 = vpop.permute.xlu0 %2470
        %2474 = vset.pattern.permute.xlu0 0
        %2475 = vperm.xlu0 %2474, %v2449
        %v2476 = vpop.permute.xlu0 %2475
        %2479 = vset.pattern.permute.xlu0 0
        %2480 = vperm.xlu0 %2479, %v2450
        %v2481 = vpop.permute.xlu0 %2480
        %2484 = vset.pattern.permute.xlu0 0
        %2485 = vperm.xlu0 %2484, %v2451
        %v2486 = vpop.permute.xlu0 %2485
        %2489 = vset.pattern.permute.xlu0 0
        %2490 = vperm.xlu0 %2489, %v2452
        %v2491 = vpop.permute.xlu0 %2490
        %2494 = vset.pattern.permute.xlu0 0
        %2495 = vperm.xlu0 %2494, %v2453
        %v2496 = vpop.permute.xlu0 %2495
        %2499 = vset.pattern.permute.xlu0 0
        %2500 = vperm.xlu0 %2499, %v2454
        %v2501 = vpop.permute.xlu0 %2500
        %2504 = vset.pattern.permute.xlu0 0
        %2505 = vperm.xlu0 %2504, %v2455
        %v2506 = vpop.permute.xlu0 %2505
        %2509 = vset.pattern.permute.xlu0 0
        %2510 = vperm.xlu0 %2509, %v2456
        %v2511 = vpop.permute.xlu0 %2510
        %2514 = vset.pattern.permute.xlu0 0
        %2515 = vperm.xlu0 %2514, %v2457
        %v2516 = vpop.permute.xlu0 %2515
        %2519 = vset.pattern.permute.xlu0 0
        %2520 = vperm.xlu0 %2519, %v2458
        %v2521 = vpop.permute.xlu0 %2520
        %2524 = vset.pattern.permute.xlu0 0
        %2525 = vperm.xlu0 %2524, %v2459
        %v2526 = vpop.permute.xlu0 %2525
        %2529 = vset.pattern.permute.xlu0 0
        %2530 = vperm.xlu0 %2529, %v2460
        %v2531 = vpop.permute.xlu0 %2530
        %2534 = vset.pattern.permute.xlu0 0
        %2535 = vperm.xlu0 %2534, %v2461
        %v2536 = vpop.permute.xlu0 %2535
        %2539 = vset.pattern.permute.xlu0 0
        %2540 = vperm.xlu0 %2539, %v2462
        %v2541 = vpop.permute.xlu0 %2540
        %v2543 = vadd.f32 %v2431, %v2466
        %v2544 = vadd.f32 %v2432, %v2471
        %v2545 = vadd.f32 %v2433, %v2476
        %v2546 = vadd.f32 %v2434, %v2481
        %v2547 = vadd.f32 %v2435, %v2486
        %v2548 = vadd.f32 %v2436, %v2491
        %v2549 = vadd.f32 %v2437, %v2496
        %v2550 = vadd.f32 %v2438, %v2501
        %v2551 = vadd.f32 %v2439, %v2506
        %v2552 = vadd.f32 %v2440, %v2511
        %v2553 = vadd.f32 %v2441, %v2516
        %v2554 = vadd.f32 %v2442, %v2521
        %v2555 = vadd.f32 %v2443, %v2526
        %v2556 = vadd.f32 %v2444, %v2531
        %v2557 = vadd.f32 %v2445, %v2536
        %v2558 = vadd.f32 %v2446, %v2541
        %v2559 = vld [vmem:[%s2] sm:$0x1]
        %v2561 = vlaneseq
        %v2562 = vshrl.u32 %v2561, 7
        %v2563 = vsub.s32 0, %v2562
        %v2564 = vrot.slane %v2559, %v2563
        %v2566 = vadd.f32 %v2543, %v2564
        %v2567 = vadd.f32 %v2544, %v2564
        %v2568 = vadd.f32 %v2545, %v2564
        %v2569 = vadd.f32 %v2546, %v2564
        %v2570 = vadd.f32 %v2547, %v2564
        %v2571 = vadd.f32 %v2548, %v2564
        %v2572 = vadd.f32 %v2549, %v2564
        %v2573 = vadd.f32 %v2550, %v2564
        %v2574 = vadd.f32 %v2551, %v2564
        %v2575 = vadd.f32 %v2552, %v2564
        %v2576 = vadd.f32 %v2553, %v2564
        %v2577 = vadd.f32 %v2554, %v2564
        %v2578 = vadd.f32 %v2555, %v2564
        %v2579 = vadd.f32 %v2556, %v2564
        %v2580 = vadd.f32 %v2557, %v2564
        %v2581 = vadd.f32 %v2558, %v2564
        %vm2582 = vcmp.ge.f32.partialorder %v2566, 0.0
        %vm2583 = vcmp.ge.f32.partialorder %v2567, 0.0
        %vm2584 = vcmp.ge.f32.partialorder %v2568, 0.0
        %vm2585 = vcmp.ge.f32.partialorder %v2569, 0.0
        %vm2586 = vcmp.ge.f32.partialorder %v2570, 0.0
        %vm2587 = vcmp.ge.f32.partialorder %v2571, 0.0
        %vm2588 = vcmp.ge.f32.partialorder %v2572, 0.0
        %vm2589 = vcmp.ge.f32.partialorder %v2573, 0.0
        %vm2590 = vcmp.ge.f32.partialorder %v2574, 0.0
        %vm2591 = vcmp.ge.f32.partialorder %v2575, 0.0
        %vm2592 = vcmp.ge.f32.partialorder %v2576, 0.0
        %vm2593 = vcmp.ge.f32.partialorder %v2577, 0.0
        %vm2594 = vcmp.ge.f32.partialorder %v2578, 0.0
        %vm2595 = vcmp.ge.f32.partialorder %v2579, 0.0
        %vm2596 = vcmp.ge.f32.partialorder %v2580, 0.0
        %vm2597 = vcmp.ge.f32.partialorder %v2581, 0.0
        %v2598 = vmul.f32 %v2566, 0.2
        %v2599 = vmul.f32 %v2567, 0.2
        %v2600 = vmul.f32 %v2568, 0.2
        %v2601 = vmul.f32 %v2569, 0.2
        %v2602 = vmul.f32 %v2570, 0.2
        %v2603 = vmul.f32 %v2571, 0.2
        %v2604 = vmul.f32 %v2572, 0.2
        %v2605 = vmul.f32 %v2573, 0.2
        %v2606 = vmul.f32 %v2574, 0.2
        %v2607 = vmul.f32 %v2575, 0.2
        %v2608 = vmul.f32 %v2576, 0.2
        %v2609 = vmul.f32 %v2577, 0.2
        %v2610 = vmul.f32 %v2578, 0.2
        %v2611 = vmul.f32 %v2579, 0.2
        %v2612 = vmul.f32 %v2580, 0.2
        %v2613 = vmul.f32 %v2581, 0.2
        %v2614 = vsel %vm2582, %v2566, %v2598
        %v2615 = vsel %vm2583, %v2567, %v2599
        %v2616 = vsel %vm2584, %v2568, %v2600
        %v2617 = vsel %vm2585, %v2569, %v2601
        %v2618 = vsel %vm2586, %v2570, %v2602
        %v2619 = vsel %vm2587, %v2571, %v2603
        %v2620 = vsel %vm2588, %v2572, %v2604
        %v2621 = vsel %vm2589, %v2573, %v2605
        %v2622 = vsel %vm2590, %v2574, %v2606
        %v2623 = vsel %vm2591, %v2575, %v2607
        %v2624 = vsel %vm2592, %v2576, %v2608
        %v2625 = vsel %vm2593, %v2577, %v2609
        %v2626 = vsel %vm2594, %v2578, %v2610
        %v2627 = vsel %vm2595, %v2579, %v2611
        %v2628 = vsel %vm2596, %v2580, %v2612
        %v2629 = vsel %vm2597, %v2581, %v2613
        %v2630 = vmul.f32 %v2614, 1.4142135
        %v2631 = vmul.f32 %v2615, 1.4142135
        %v2632 = vmul.f32 %v2616, 1.4142135
        %v2633 = vmul.f32 %v2617, 1.4142135
        %v2634 = vmul.f32 %v2618, 1.4142135
        %v2635 = vmul.f32 %v2619, 1.4142135
        %v2636 = vmul.f32 %v2620, 1.4142135
        %v2637 = vmul.f32 %v2621, 1.4142135
        %v2638 = vmul.f32 %v2622, 1.4142135
        %v2639 = vmul.f32 %v2623, 1.4142135
        %v2640 = vmul.f32 %v2624, 1.4142135
        %v2641 = vmul.f32 %v2625, 1.4142135
        %v2642 = vmul.f32 %v2626, 1.4142135
        %v2643 = vmul.f32 %v2627, 1.4142135
        %v2644 = vmul.f32 %v2628, 1.4142135
        %v2645 = vmul.f32 %v2629, 1.4142135
        %2646 = vst [vmem:[%s318] sm:$0xff] %v2630
        %2647 = vst [vmem:[%s318 + $0x8] sm:$0xff] %v2631
        %2648 = vst [vmem:[%s318 + $0x10] sm:$0xff] %v2632
        %2649 = vst [vmem:[%s318 + $0x18] sm:$0xff] %v2633
        %2650 = vst [vmem:[%s318 + $0x20] sm:$0xff] %v2634
        %2651 = vst [vmem:[%s318 + $0x28] sm:$0xff] %v2635
        %2652 = vst [vmem:[%s318 + $0x30] sm:$0xff] %v2636
        %2653 = vst [vmem:[%s318 + $0x38] sm:$0xff] %v2637
        %2654 = vst [vmem:[%s318 + $0x40] sm:$0xff] %v2638
        %2655 = vst [vmem:[%s318 + $0x48] sm:$0xff] %v2639
        %2656 = vst [vmem:[%s318 + $0x50] sm:$0xff] %v2640
        %2657 = vst [vmem:[%s318 + $0x58] sm:$0xff] %v2641
        %2658 = vst [vmem:[%s318 + $0x60] sm:$0xff] %v2642
        %2659 = vst [vmem:[%s318 + $0x68] sm:$0xff] %v2643
        %2660 = vst [vmem:[%s318 + $0x70] sm:$0xff] %v2644
        %2661 = vst [vmem:[%s318 + $0x78] sm:$0xff] %v2645
        %s2662 = sand.u32 %s192, 1
        %s2663 = scalar_lea.sflag [#allocation4], %s2662
        %s2664 = sand.u32 %s192, 1
        %s2665 = smul.addr %s2664, 128
        %s2666 = scalar_lea.vmem [#allocation3], %s2665
        // Predicated region
        $region49: #{tpu_custom_call.1} parent=43 // pred_check
          %p2667 = pneg %p202
        $region50: #{tpu_custom_call.1} parent=43 // pred_check_branch
          %2669 = sbr.rel (%p2667) target = $region52
        $region51: #{tpu_custom_call.1} parent=43 // pred_region
          %s2670 = smul.u32 16, %s25
          %s2672 = ssub.s32 2048, 2048
          %2673 = vsyncadd %s2663, %s2672
          %s2674 = smul.addr %s24, 32
          %s2675 = sadd.s32 %s2670, %s2674
          %s2676 = smul.addr %s2675, 128
          %s2677 = scalar_lea.hbm %s6, %s2676
          %s2678 = sshll.u32 %s2666, 4
          %s2679 = int_to_ptr.vmem [resolvable:$true] %s2678
          %2684 = dma.vmem_to_hbm [thread:$0]  %s2679, 2048, %s2677, %s2663, 128, 128, 8
        $region52: #{tpu_custom_call.1} parent=43 // pred_fallthru
          _
      $region44: #{tpu_custom_call.1} parent=5 // pred_fallthru
        _
      %p2685 = scmp.le.s32.totalorder 2, %s15
      // Predicated region
      $region53: #{tpu_custom_call.1} parent=5 // pred_check
        %p2686 = pneg %p2685
      $region54: #{tpu_custom_call.1} parent=5 // pred_check_branch
        %2688 = sbr.rel (%p2686) target = $region56
      $region55: #{tpu_custom_call.1} parent=5 // pred_region
        %s2689 = ssub.s32 %s15, 2
        // Predicated region
        $region57: #{tpu_custom_call.1} parent=55 // pred_check
          %p2690 = pneg %p208
        $region58: #{tpu_custom_call.1} parent=55 // pred_check_branch
          %2692 = sbr.rel (%p2690) target = $region60
        $region59: #{tpu_custom_call.1} parent=55 // pred_region
          %s2693 = sand.u32 %s193, 1
          %s2694 = scalar_lea.sflag [#allocation4], %s2693
          %s2695 = sand.u32 %s193, 1
          %s2696 = smul.addr %s2695, 128
          %s2697 = scalar_lea.vmem [#allocation3], %s2696
          %2698 = dma.done %s2694, 2048
        $region60: #{tpu_custom_call.1} parent=55 // pred_fallthru
          _
      $region56: #{tpu_custom_call.1} parent=5 // pred_fallthru
        _
    $region6: #{tpu_custom_call.1} parent=1 // loop_footer
      %s19 = sadd.s32 1, %s15
    $region7: #{tpu_custom_call.1} parent=1 // loop_footer_branch
      %14 = sbr.rel target = $region3
    $region8: #{tpu_custom_call.1} parent=1 // loop_exit
      _
    %2699 = vsyncpa [#allocation4], 1
    %s2700 = scalar_lea.sflag [#allocation4], 1
    %2701 = vsyncpa %s2700, 1

</llo_original>
